<compile_context>
chip_gen: v7x
topology: tpu7x:2x2x1
jax: 0.10.0
libtpu: 0.0.40
codegen_flags: <defaults>
</compile_context>

<pallas_src>
import jax
import jax.numpy as jnp
from jax import lax
from jax.experimental import pallas as pl
from jax.experimental.pallas import tpu as pltpu

# ----------------------------- configuration -------------------------------
B = 8              # graphs per batch
N = 16             # nodes per graph
D = 32             # hidden_size
H = 4              # n_head
DH = D // H        # per-head dim
POOL_RATIO = 0.5
K = int(N * POOL_RATIO)     # nodes kept by SAGPool
NEG_SLOPE = 0.2             # args.leaky_relu
NEG_BIG = -1e30

NB = 2             # grid steps (2 -> feeds both TCs on v7x; near-free on v5e/v6e)
GB = B // NB       # graphs per grid step
R = GB * N         # node rows per grid step (64): 4 graphs as one block-diag graph


# ----------------- kernel: GAT conv + ReLU + SAGPool score + gating --------
def gnn_conv_pool_kernel(x_ref, nmask_ref, anorm_ref, angle_ref,
                         w_ref, albd_ref, arbd_ref, wrel_ref, ws_ref,
                         feat_ref, score_ref):
    # ---- node projection: single M=R MXU matmul (bf16 in, f32 acc) ---------
    h = jnp.dot(x_ref[...], w_ref[...],
                preferred_element_type=jnp.float32)                    # (R, D) f32
    hb = h.astype(jnp.bfloat16)

    # ---- attention logit pieces for ALL heads (3 matmuls total) ------------
    el_cols = jnp.dot(hb, albd_ref[...],
                      preferred_element_type=jnp.float32)              # (R, H)
    er_rows = lax.dot_general(arbd_ref[...], hb, (((1,), (1,)), ((), ())),
                              preferred_element_type=jnp.float32)      # (H, R)
    rel_c = jnp.dot(angle_ref[...], wrel_ref[...],
                    preferred_element_type=jnp.float32)                # (R, H*N)

    # 0/1 tiler replicating the compact per-head rel columns (j = 0..N-1)
    # across all GB graph slots of the block-diagonal column layout; the
    # wrong (cross-graph) copies are killed by the adjacency mask below.
    jrow = lax.broadcasted_iota(jnp.int32, (N, R), 0)
    ccol = lax.broadcasted_iota(jnp.int32, (N, R), 1)
    tile_eye = (jrow == (ccol & (N - 1))).astype(jnp.bfloat16)         # (N, R)

    neg_mask = nmask_ref[...]                                          # (R, R) f32

    pieces = []
    for hh in range(H):   # H=4: only cheap static slices + tiny tiling matmuls
        rel_h = jnp.dot(rel_c[:, hh * N:(hh + 1) * N].astype(jnp.bfloat16),
                        tile_eye, preferred_element_type=jnp.float32)  # (R, R)
        pieces.append(el_cols[:, hh:hh + 1] + er_rows[hh:hh + 1, :] + rel_h)
    logits = jnp.stack(pieces, axis=0)                                 # (H, R, R)

    # leaky-relu, block-diagonal adjacency mask, ONE batched masked softmax
    logits = jnp.where(logits > 0.0, logits, NEG_SLOPE * logits)
    logits = logits + neg_mask[None, :, :]
    m = jnp.max(logits, axis=-1, keepdims=True)
    p = jnp.exp(logits - m)                       # masked entries underflow to 0
    denom = jnp.sum(p, axis=-1, keepdims=True)    # exact f32 row sum
    attn = (p * pl.reciprocal(denom, approx=False)).astype(jnp.bfloat16)

    # ---- aggregation: single K = H*R matmul -------------------------------
    # head-masked value tables stacked along the contraction axis
    dcol = lax.broadcasted_iota(jnp.int32, (R, D), 1)
    hm = jnp.concatenate(
        [jnp.where((dcol >= hh * DH) & (dcol < (hh + 1) * DH),
                   h, 0.0).astype(jnp.bfloat16) for hh in range(H)],
        axis=0)                                                        # (H*R, D)
    attn_cat = jnp.concatenate([attn[hh] for hh in range(H)], axis=1)  # (R, H*R)
    conv = jnp.dot(attn_cat, hm, preferred_element_type=jnp.float32)   # (R, D)

    out = jnp.maximum(conv, 0.0)                                       # ReLU

    # ---- SAGPool score: sv on VPU/XLU; tiny f32 matvec keeps top-k faithful
    sv = jnp.sum(out * ws_ref[...], axis=-1, keepdims=True)            # (R, 1)
    score = jnp.dot(anorm_ref[...], sv,
                    preferred_element_type=jnp.float32)                # (R, 1)

    # ---- fused SAGPool gating; slim separate outputs ------------------------
    feat_ref[...] = out * jnp.tanh(score)
    score_ref[...] = score


# ------------------------------- wrapper -----------------------------------
@jax.jit
def conv_pool_block(x, adj, angle_h, params):
    w, al, ar, arel, ws = params

    # graph-static precompute (XLA): block-diagonal mask / normalized adjacency
    deg = jnp.sum(adj, axis=-1, keepdims=True)              # >= 1 (self loops)
    adj4 = adj.reshape(NB, GB, N, N)
    anorm4 = (adj / deg).reshape(NB, GB, N, N)
    eye_g = jnp.eye(GB, dtype=jnp.float32)
    adj_bd = jnp.einsum('bgij,gh->bgihj', adj4, eye_g).reshape(NB * R, R)
    anorm_bd = jnp.einsum('bgij,gh->bgihj', anorm4, eye_g).reshape(NB * R, R)
    neg_mask_bd = jnp.where(adj_bd > 0.0, 0.0, NEG_BIG).astype(jnp.float32)

    # block-diagonal per-head attention vectors
    eye_h = jnp.eye(H, dtype=jnp.float32)
    al_bd = (eye_h[:, :, None] * al[:, None, :]).reshape(H, D)       # (H, D)
    ar_bd = (eye_h[:, :, None] * ar[:, None, :]).reshape(H, D)       # (H, D)
    albd = al_bd.T                                                   # (D, H)
    # rel weight: angle column (j, d) -> logit column (h, j)
    wrel = jnp.einsum('jk,dh->jdhk', jnp.eye(N, dtype=jnp.float32),
                      arel).reshape(N * D, H * N)                    # (N*D, H*N)

    # bf16 inputs (halves the only non-trivial DMA stream); f32 acc in-kernel
    x_flat = x.reshape(B * N, D).astype(jnp.bfloat16)
    angle2 = angle_h.reshape(B * N, N * D).astype(jnp.bfloat16)

    feats, score = pl.pallas_call(
        gnn_conv_pool_kernel,
        out_shape=(jax.ShapeDtypeStruct((B * N, D), jnp.float32),
                   jax.ShapeDtypeStruct((B * N, 1), jnp.float32)),
        grid=(NB,),
        in_specs=[
            pl.BlockSpec((R, D), lambda b: (b, 0)),          # x (bf16)
            pl.BlockSpec((R, R), lambda b: (b, 0)),          # neg mask (block-diag)
            pl.BlockSpec((R, R), lambda b: (b, 0)),          # anorm    (block-diag)
            pl.BlockSpec((R, N * D), lambda b: (b, 0)),      # angle (bf16)
            pl.BlockSpec((D, D), lambda b: (0, 0)),          # w (bf16)
            pl.BlockSpec((D, H), lambda b: (0, 0)),          # albd (bf16)
            pl.BlockSpec((H, D), lambda b: (0, 0)),          # ar_bd (bf16)
            pl.BlockSpec((N * D, H * N), lambda b: (0, 0)),  # wrel (bf16)
            pl.BlockSpec((1, D), lambda b: (0, 0)),          # ws row (f32)
        ],
        out_specs=(pl.BlockSpec((R, D), lambda b: (b, 0)),
                   pl.BlockSpec((R, 1), lambda b: (b, 0))),
        compiler_params=pltpu.CompilerParams(
            dimension_semantics=("parallel",)),
    )(x_flat, neg_mask_bd, anorm_bd, angle2,
      w.astype(jnp.bfloat16), albd.astype(jnp.bfloat16),
      ar_bd.astype(jnp.bfloat16), wrel.astype(jnp.bfloat16),
      ws.reshape(1, D))

    gated = feats.reshape(B, N, D)                 # gated features, all nodes
    score = score.reshape(B, N)                    # SAGPool scores

    # SAGPool top-k node selection + readout (data-dependent gather + tiny
    # (K,D) reduction: plain JAX glue; a second pallas_call is pure overhead)
    _, idx = lax.top_k(score, K)                                        # (B, K)
    out_pooled = jnp.take_along_axis(gated, idx[:, :, None], axis=1)    # (B, K, D)
    adj_rows = jnp.take_along_axis(adj, idx[:, :, None], axis=1)        # (B, K, N)
    adj_sel = jnp.take_along_axis(adj_rows, idx[:, None, :], axis=2)    # (B, K, K)
    g_out = jnp.concatenate([jnp.mean(out_pooled, axis=1),
                             jnp.max(out_pooled, axis=1)], axis=-1)     # (B, 2D)

    # mirrors: return (graph, out, g_out, graph.edata.pop('angle_h'))
    return adj_sel, out_pooled, g_out, angle_h


def init_params(key):
    k1, k2, k3, k4, k5 = jax.random.split(key, 5)
    scale = 0.1
    w = scale * jax.random.normal(k1, (D, D), jnp.float32)       # ent projection
    al = scale * jax.random.normal(k2, (H, DH), jnp.float32)     # attn (src)
    ar = scale * jax.random.normal(k3, (H, DH), jnp.float32)     # attn (dst)
    arel = scale * jax.random.normal(k4, (D, H), jnp.float32)    # attn (relation/angle)
    ws = scale * jax.random.normal(k5, (D, 1), jnp.float32)      # SAGPool score
    return (w, al, ar, arel, ws)


if __name__ == "__main__":
    key = jax.random.PRNGKey(0)
    k_adj, k_x, k_ang, k_par = jax.random.split(key, 4)

    # deterministic synthetic graphs: symmetric random adjacency + self loops
    a = (jax.random.uniform(k_adj, (B, N, N)) < 0.3).astype(jnp.float32)
    adj = jnp.clip(a + jnp.swapaxes(a, 1, 2) + jnp.eye(N, dtype=jnp.float32)[None],
                   0.0, 1.0)

    x = jax.random.normal(k_x, (B, N, D), jnp.float32)
    angle_h = jax.random.normal(k_ang, (B, N, N, D), jnp.float32) * adj[..., None]

    params = init_params(k_par)

    adj_pooled, out_pooled, g_out, angle_back = conv_pool_block(x, adj, angle_h, params)
    jax.block_until_ready((adj_pooled, out_pooled, g_out, angle_back))

    assert adj_pooled.shape == (B, K, K)
    assert out_pooled.shape == (B, K, D)
    assert g_out.shape == (B, 2 * D)
    assert angle_back.shape == (B, N, N, D)
    assert bool(jnp.all(jnp.isfinite(g_out)))
    print("KERNEL_OK")
</pallas_src>

<mosaic_0001>
module attributes {stable_mosaic.version = 11 : i64} {
  func.func @gnn_conv_pool_kernel(%arg0: i32, %arg1: memref<64x32xbf16, #tpu.memory_space<vmem>>, %arg2: memref<64x64xf32, #tpu.memory_space<vmem>>, %arg3: memref<64x64xf32, #tpu.memory_space<vmem>>, %arg4: memref<64x512xbf16, #tpu.memory_space<vmem>>, %arg5: memref<32x32xbf16, #tpu.memory_space<vmem>>, %arg6: memref<32x4xbf16, #tpu.memory_space<vmem>>, %arg7: memref<4x32xbf16, #tpu.memory_space<vmem>>, %arg8: memref<512x64xbf16, #tpu.memory_space<vmem>>, %arg9: memref<1x32xf32, #tpu.memory_space<vmem>>, %arg10: memref<64x32xf32, #tpu.memory_space<vmem>>, %arg11: memref<64x1xf32, #tpu.memory_space<vmem>>) attributes {dimension_semantics = [#tpu.dimension_semantics<parallel>], iteration_bounds = array<i64: 2>, scalar_prefetch = 0 : i64, scratch_operands = 0 : i64, tpu.core_type = #tpu.core_type<tc>, window_params = [{transform_indices = @transform_0, window_bounds = array<i64: 64, 32>}, {transform_indices = @transform_1, window_bounds = array<i64: 64, 64>}, {transform_indices = @transform_2, window_bounds = array<i64: 64, 64>}, {transform_indices = @transform_3, window_bounds = array<i64: 64, 512>}, {pipeline_mode = #tpu.pipeline_mode<synchronous>, transform_indices = @transform_4, window_bounds = array<i64: 32, 32>}, {pipeline_mode = #tpu.pipeline_mode<synchronous>, transform_indices = @transform_5, window_bounds = array<i64: 32, 4>}, {pipeline_mode = #tpu.pipeline_mode<synchronous>, transform_indices = @transform_6, window_bounds = array<i64: 4, 32>}, {pipeline_mode = #tpu.pipeline_mode<synchronous>, transform_indices = @transform_7, window_bounds = array<i64: 512, 64>}, {pipeline_mode = #tpu.pipeline_mode<synchronous>, transform_indices = @transform_8, window_bounds = array<i64: 1, 32>}, {transform_indices = @transform_9, window_bounds = array<i64: 64, 32>}, {transform_indices = @transform_10, window_bounds = array<i64: 64, 1>}]} {
    %c0 = arith.constant 0 : index
    %c0_0 = arith.constant 0 : index
    %0 = vector.load %arg1[%c0, %c0_0] : memref<64x32xbf16, #tpu.memory_space<vmem>>, vector<64x32xbf16>
    %c0_1 = arith.constant 0 : index
    %c0_2 = arith.constant 0 : index
    %1 = vector.load %arg5[%c0_1, %c0_2] : memref<32x32xbf16, #tpu.memory_space<vmem>>, vector<32x32xbf16>
    %cst = arith.constant dense<0.000000e+00> : vector<64x32xf32>
    %2 = tpu.matmul %0, %1, %cst {dimension_numbers = #tpu.dot_dimension_numbers<[1], [0], [0], [1], [0, 0, 1, 1], [], []>} : vector<64x32xbf16>, vector<32x32xbf16>, vector<64x32xf32> -> vector<64x32xf32>
    %3 = arith.truncf %2 : vector<64x32xf32> to vector<64x32xbf16>
    %c0_3 = arith.constant 0 : index
    %c0_4 = arith.constant 0 : index
    %4 = vector.load %arg6[%c0_3, %c0_4] : memref<32x4xbf16, #tpu.memory_space<vmem>>, vector<32x4xbf16>
    %cst_5 = arith.constant dense<0.000000e+00> : vector<64x4xf32>
    %5 = tpu.matmul %3, %4, %cst_5 {dimension_numbers = #tpu.dot_dimension_numbers<[1], [0], [0], [1], [0, 0, 1, 1], [], []>} : vector<64x32xbf16>, vector<32x4xbf16>, vector<64x4xf32> -> vector<64x4xf32>
    %c0_6 = arith.constant 0 : index
    %c0_7 = arith.constant 0 : index
    %6 = vector.load %arg7[%c0_6, %c0_7] : memref<4x32xbf16, #tpu.memory_space<vmem>>, vector<4x32xbf16>
    %cst_8 = arith.constant dense<0.000000e+00> : vector<4x64xf32>
    %7 = tpu.matmul %6, %3, %cst_8 {dimension_numbers = #tpu.dot_dimension_numbers<[1], [1], [0], [0], [0, 0, 1, 0], [], []>} : vector<4x32xbf16>, vector<64x32xbf16>, vector<4x64xf32> -> vector<4x64xf32>
    %c0_9 = arith.constant 0 : index
    %c0_10 = arith.constant 0 : index
    %8 = vector.load %arg4[%c0_9, %c0_10] : memref<64x512xbf16, #tpu.memory_space<vmem>>, vector<64x512xbf16>
    %c0_11 = arith.constant 0 : index
    %c0_12 = arith.constant 0 : index
    %9 = vector.load %arg8[%c0_11, %c0_12] : memref<512x64xbf16, #tpu.memory_space<vmem>>, vector<512x64xbf16>
    %cst_13 = arith.constant dense<0.000000e+00> : vector<64x64xf32>
    %10 = tpu.matmul %8, %9, %cst_13 {dimension_numbers = #tpu.dot_dimension_numbers<[1], [0], [0], [1], [0, 0, 1, 1], [], []>} : vector<64x512xbf16>, vector<512x64xbf16>, vector<64x64xf32> -> vector<64x64xf32>
    %11 = tpu.iota {dimensions = array<i32: 0>} : vector<16x64xi32>
    %12 = tpu.iota {dimensions = array<i32: 1>} : vector<16x64xi32>
    %c15_i32 = arith.constant 15 : i32
    %13 = vector.broadcast %c15_i32 : i32 to vector<16x64xi32>
    %14 = arith.andi %12, %13 : vector<16x64xi32>
    %15 = arith.cmpi eq, %11, %14 : vector<16x64xi32>
    %16 = arith.extui %15 : vector<16x64xi1> to vector<16x64xi32>
    %17 = arith.sitofp %16 : vector<16x64xi32> to vector<16x64xf32>
    %18 = arith.truncf %17 : vector<16x64xf32> to vector<16x64xbf16>
    %c0_14 = arith.constant 0 : index
    %c0_15 = arith.constant 0 : index
    %19 = vector.load %arg2[%c0_14, %c0_15] : memref<64x64xf32, #tpu.memory_space<vmem>>, vector<64x64xf32>
    %20 = vector.extract_strided_slice %10 {offsets = [0, 0], sizes = [64, 16], strides = [1, 1]} : vector<64x64xf32> to vector<64x16xf32>
    %21 = arith.truncf %20 : vector<64x16xf32> to vector<64x16xbf16>
    %cst_16 = arith.constant dense<0.000000e+00> : vector<64x64xf32>
    %22 = tpu.matmul %21, %18, %cst_16 {dimension_numbers = #tpu.dot_dimension_numbers<[1], [0], [0], [1], [0, 0, 1, 1], [], []>} : vector<64x16xbf16>, vector<16x64xbf16>, vector<64x64xf32> -> vector<64x64xf32>
    %23 = vector.extract_strided_slice %5 {offsets = [0, 0], sizes = [64, 1], strides = [1, 1]} : vector<64x4xf32> to vector<64x1xf32>
    %24 = vector.extract_strided_slice %7 {offsets = [0, 0], sizes = [1, 64], strides = [1, 1]} : vector<4x64xf32> to vector<1x64xf32>
    %25 = vector.broadcast %23 : vector<64x1xf32> to vector<64x64xf32>
    %26 = vector.broadcast %24 : vector<1x64xf32> to vector<64x64xf32>
    %27 = arith.addf %25, %26 : vector<64x64xf32>
    %28 = arith.addf %27, %22 : vector<64x64xf32>
    %29 = vector.extract_strided_slice %10 {offsets = [0, 16], sizes = [64, 16], strides = [1, 1]} : vector<64x64xf32> to vector<64x16xf32>
    %30 = arith.truncf %29 : vector<64x16xf32> to vector<64x16xbf16>
    %cst_17 = arith.constant dense<0.000000e+00> : vector<64x64xf32>
    %31 = tpu.matmul %30, %18, %cst_17 {dimension_numbers = #tpu.dot_dimension_numbers<[1], [0], [0], [1], [0, 0, 1, 1], [], []>} : vector<64x16xbf16>, vector<16x64xbf16>, vector<64x64xf32> -> vector<64x64xf32>
    %32 = vector.extract_strided_slice %5 {offsets = [0, 1], sizes = [64, 1], strides = [1, 1]} : vector<64x4xf32> to vector<64x1xf32>
    %33 = vector.extract_strided_slice %7 {offsets = [1, 0], sizes = [1, 64], strides = [1, 1]} : vector<4x64xf32> to vector<1x64xf32>
    %34 = vector.broadcast %32 : vector<64x1xf32> to vector<64x64xf32>
    %35 = vector.broadcast %33 : vector<1x64xf32> to vector<64x64xf32>
    %36 = arith.addf %34, %35 : vector<64x64xf32>
    %37 = arith.addf %36, %31 : vector<64x64xf32>
    %38 = vector.extract_strided_slice %10 {offsets = [0, 32], sizes = [64, 16], strides = [1, 1]} : vector<64x64xf32> to vector<64x16xf32>
    %39 = arith.truncf %38 : vector<64x16xf32> to vector<64x16xbf16>
    %cst_18 = arith.constant dense<0.000000e+00> : vector<64x64xf32>
    %40 = tpu.matmul %39, %18, %cst_18 {dimension_numbers = #tpu.dot_dimension_numbers<[1], [0], [0], [1], [0, 0, 1, 1], [], []>} : vector<64x16xbf16>, vector<16x64xbf16>, vector<64x64xf32> -> vector<64x64xf32>
    %41 = vector.extract_strided_slice %5 {offsets = [0, 2], sizes = [64, 1], strides = [1, 1]} : vector<64x4xf32> to vector<64x1xf32>
    %42 = vector.extract_strided_slice %7 {offsets = [2, 0], sizes = [1, 64], strides = [1, 1]} : vector<4x64xf32> to vector<1x64xf32>
    %43 = vector.broadcast %41 : vector<64x1xf32> to vector<64x64xf32>
    %44 = vector.broadcast %42 : vector<1x64xf32> to vector<64x64xf32>
    %45 = arith.addf %43, %44 : vector<64x64xf32>
    %46 = arith.addf %45, %40 : vector<64x64xf32>
    %47 = vector.extract_strided_slice %10 {offsets = [0, 48], sizes = [64, 16], strides = [1, 1]} : vector<64x64xf32> to vector<64x16xf32>
    %48 = arith.truncf %47 : vector<64x16xf32> to vector<64x16xbf16>
    %cst_19 = arith.constant dense<0.000000e+00> : vector<64x64xf32>
    %49 = tpu.matmul %48, %18, %cst_19 {dimension_numbers = #tpu.dot_dimension_numbers<[1], [0], [0], [1], [0, 0, 1, 1], [], []>} : vector<64x16xbf16>, vector<16x64xbf16>, vector<64x64xf32> -> vector<64x64xf32>
    %50 = vector.extract_strided_slice %5 {offsets = [0, 3], sizes = [64, 1], strides = [1, 1]} : vector<64x4xf32> to vector<64x1xf32>
    %51 = vector.extract_strided_slice %7 {offsets = [3, 0], sizes = [1, 64], strides = [1, 1]} : vector<4x64xf32> to vector<1x64xf32>
    %52 = vector.broadcast %50 : vector<64x1xf32> to vector<64x64xf32>
    %53 = vector.broadcast %51 : vector<1x64xf32> to vector<64x64xf32>
    %54 = arith.addf %52, %53 : vector<64x64xf32>
    %55 = arith.addf %54, %49 : vector<64x64xf32>
    %56 = vector.shape_cast %28 : vector<64x64xf32> to vector<1x64x64xf32>
    %57 = vector.shape_cast %37 : vector<64x64xf32> to vector<1x64x64xf32>
    %58 = vector.shape_cast %46 : vector<64x64xf32> to vector<1x64x64xf32>
    %59 = vector.shape_cast %55 : vector<64x64xf32> to vector<1x64x64xf32>
    %60 = tpu.concatenate %56, %57, %58, %59 in 0 : vector<1x64x64xf32>, vector<1x64x64xf32>, vector<1x64x64xf32>, vector<1x64x64xf32> -> vector<4x64x64xf32>
    %cst_20 = arith.constant 0.000000e+00 : f32
    %61 = vector.broadcast %cst_20 : f32 to vector<4x64x64xf32>
    %62 = arith.cmpf ogt, %60, %61 : vector<4x64x64xf32>
    %cst_21 = arith.constant 2.000000e-01 : f32
    %63 = vector.broadcast %cst_21 : f32 to vector<4x64x64xf32>
    %64 = arith.mulf %63, %60 : vector<4x64x64xf32>
    %65 = arith.select %62, %60, %64 : vector<4x64x64xi1>, vector<4x64x64xf32>
    %66 = vector.shape_cast %19 : vector<64x64xf32> to vector<1x64x64xf32>
    %67 = vector.broadcast %66 : vector<1x64x64xf32> to vector<4x64x64xf32>
    %68 = arith.addf %65, %67 : vector<4x64x64xf32>
    %cst_22 = arith.constant dense<0xFF800000> : vector<4x64xf32>
    %69 = vector.multi_reduction <maximumf>, %68, %cst_22 [2] : vector<4x64x64xf32> to vector<4x64xf32>
    %70 = vector.shape_cast %69 : vector<4x64xf32> to vector<4x64x1xf32>
    %71 = vector.broadcast %70 : vector<4x64x1xf32> to vector<4x64x64xf32>
    %72 = arith.subf %68, %71 : vector<4x64x64xf32>
    %73 = math.exp %72 : vector<4x64x64xf32>
    %cst_23 = arith.constant dense<0.000000e+00> : vector<4x64xf32>
    %74 = vector.multi_reduction <add>, %73, %cst_23 [2] : vector<4x64x64xf32> to vector<4x64xf32>
    %75 = vector.shape_cast %74 : vector<4x64xf32> to vector<4x64x1xf32>
    %76 = tpu.reciprocal %75 : vector<4x64x1xf32> -> vector<4x64x1xf32>
    %77 = vector.broadcast %76 : vector<4x64x1xf32> to vector<4x64x64xf32>
    %78 = arith.mulf %73, %77 : vector<4x64x64xf32>
    %79 = arith.truncf %78 : vector<4x64x64xf32> to vector<4x64x64xbf16>
    %80 = tpu.iota {dimensions = array<i32: 1>} : vector<64x32xi32>
    %c0_i32 = arith.constant 0 : i32
    %81 = vector.broadcast %c0_i32 : i32 to vector<64x32xi32>
    %82 = arith.cmpi sge, %80, %81 : vector<64x32xi32>
    %c8_i32 = arith.constant 8 : i32
    %83 = vector.broadcast %c8_i32 : i32 to vector<64x32xi32>
    %84 = arith.cmpi slt, %80, %83 : vector<64x32xi32>
    %85 = arith.andi %82, %84 : vector<64x32xi1>
    %cst_24 = arith.constant 0.000000e+00 : f32
    %86 = vector.broadcast %cst_24 : f32 to vector<64x32xf32>
    %87 = arith.select %85, %2, %86 : vector<64x32xi1>, vector<64x32xf32>
    %88 = arith.truncf %87 : vector<64x32xf32> to vector<64x32xbf16>
    %c8_i32_25 = arith.constant 8 : i32
    %89 = vector.broadcast %c8_i32_25 : i32 to vector<64x32xi32>
    %90 = arith.cmpi sge, %80, %89 : vector<64x32xi32>
    %c16_i32 = arith.constant 16 : i32
    %91 = vector.broadcast %c16_i32 : i32 to vector<64x32xi32>
    %92 = arith.cmpi slt, %80, %91 : vector<64x32xi32>
    %93 = arith.andi %90, %92 : vector<64x32xi1>
    %cst_26 = arith.constant 0.000000e+00 : f32
    %94 = vector.broadcast %cst_26 : f32 to vector<64x32xf32>
    %95 = arith.select %93, %2, %94 : vector<64x32xi1>, vector<64x32xf32>
    %96 = arith.truncf %95 : vector<64x32xf32> to vector<64x32xbf16>
    %c16_i32_27 = arith.constant 16 : i32
    %97 = vector.broadcast %c16_i32_27 : i32 to vector<64x32xi32>
    %98 = arith.cmpi sge, %80, %97 : vector<64x32xi32>
    %c24_i32 = arith.constant 24 : i32
    %99 = vector.broadcast %c24_i32 : i32 to vector<64x32xi32>
    %100 = arith.cmpi slt, %80, %99 : vector<64x32xi32>
    %101 = arith.andi %98, %100 : vector<64x32xi1>
    %cst_28 = arith.constant 0.000000e+00 : f32
    %102 = vector.broadcast %cst_28 : f32 to vector<64x32xf32>
    %103 = arith.select %101, %2, %102 : vector<64x32xi1>, vector<64x32xf32>
    %104 = arith.truncf %103 : vector<64x32xf32> to vector<64x32xbf16>
    %c24_i32_29 = arith.constant 24 : i32
    %105 = vector.broadcast %c24_i32_29 : i32 to vector<64x32xi32>
    %106 = arith.cmpi sge, %80, %105 : vector<64x32xi32>
    %c32_i32 = arith.constant 32 : i32
    %107 = vector.broadcast %c32_i32 : i32 to vector<64x32xi32>
    %108 = arith.cmpi slt, %80, %107 : vector<64x32xi32>
    %109 = arith.andi %106, %108 : vector<64x32xi1>
    %cst_30 = arith.constant 0.000000e+00 : f32
    %110 = vector.broadcast %cst_30 : f32 to vector<64x32xf32>
    %111 = arith.select %109, %2, %110 : vector<64x32xi1>, vector<64x32xf32>
    %112 = arith.truncf %111 : vector<64x32xf32> to vector<64x32xbf16>
    %113 = tpu.concatenate %88, %96, %104, %112 in 0 : vector<64x32xbf16>, vector<64x32xbf16>, vector<64x32xbf16>, vector<64x32xbf16> -> vector<256x32xbf16>
    %114 = vector.extract_strided_slice %79 {offsets = [0, 0, 0], sizes = [1, 64, 64], strides = [1, 1, 1]} : vector<4x64x64xbf16> to vector<1x64x64xbf16>
    %115 = vector.shape_cast %114 : vector<1x64x64xbf16> to vector<64x64xbf16>
    %116 = vector.extract_strided_slice %79 {offsets = [1, 0, 0], sizes = [1, 64, 64], strides = [1, 1, 1]} : vector<4x64x64xbf16> to vector<1x64x64xbf16>
    %117 = vector.shape_cast %116 : vector<1x64x64xbf16> to vector<64x64xbf16>
    %118 = vector.extract_strided_slice %79 {offsets = [2, 0, 0], sizes = [1, 64, 64], strides = [1, 1, 1]} : vector<4x64x64xbf16> to vector<1x64x64xbf16>
    %119 = vector.shape_cast %118 : vector<1x64x64xbf16> to vector<64x64xbf16>
    %120 = vector.extract_strided_slice %79 {offsets = [3, 0, 0], sizes = [1, 64, 64], strides = [1, 1, 1]} : vector<4x64x64xbf16> to vector<1x64x64xbf16>
    %121 = vector.shape_cast %120 : vector<1x64x64xbf16> to vector<64x64xbf16>
    %122 = tpu.concatenate %115, %117, %119, %121 in 1 : vector<64x64xbf16>, vector<64x64xbf16>, vector<64x64xbf16>, vector<64x64xbf16> -> vector<64x256xbf16>
    %cst_31 = arith.constant dense<0.000000e+00> : vector<64x32xf32>
    %123 = tpu.matmul %122, %113, %cst_31 {dimension_numbers = #tpu.dot_dimension_numbers<[1], [0], [0], [1], [0, 0, 1, 1], [], []>} : vector<64x256xbf16>, vector<256x32xbf16>, vector<64x32xf32> -> vector<64x32xf32>
    %cst_32 = arith.constant 0.000000e+00 : f32
    %124 = vector.broadcast %cst_32 : f32 to vector<64x32xf32>
    %125 = arith.maximumf %123, %124 : vector<64x32xf32>
    %c0_33 = arith.constant 0 : index
    %c0_34 = arith.constant 0 : index
    %126 = vector.load %arg9[%c0_33, %c0_34] : memref<1x32xf32, #tpu.memory_space<vmem>>, vector<1x32xf32>
    %127 = vector.broadcast %126 : vector<1x32xf32> to vector<64x32xf32>
    %128 = arith.mulf %125, %127 : vector<64x32xf32>
    %cst_35 = arith.constant dense<0.000000e+00> : vector<64xf32>
    %129 = vector.multi_reduction <add>, %128, %cst_35 [1] : vector<64x32xf32> to vector<64xf32>
    %130 = vector.shape_cast %129 : vector<64xf32> to vector<64x1xf32>
    %c0_36 = arith.constant 0 : index
    %c0_37 = arith.constant 0 : index
    %131 = vector.load %arg3[%c0_36, %c0_37] : memref<64x64xf32, #tpu.memory_space<vmem>>, vector<64x64xf32>
    %cst_38 = arith.constant dense<0.000000e+00> : vector<64x1xf32>
    %132 = tpu.matmul %131, %130, %cst_38 {dimension_numbers = #tpu.dot_dimension_numbers<[1], [0], [0], [1], [0, 0, 1, 1], [], []>} : vector<64x64xf32>, vector<64x1xf32>, vector<64x1xf32> -> vector<64x1xf32>
    %133 = math.tanh %132 : vector<64x1xf32>
    %134 = vector.broadcast %133 : vector<64x1xf32> to vector<64x32xf32>
    %135 = arith.mulf %125, %134 : vector<64x32xf32>
    %c0_39 = arith.constant 0 : index
    %c0_40 = arith.constant 0 : index
    %136 = vector.load %arg10[%c0_39, %c0_40] : memref<64x32xf32, #tpu.memory_space<vmem>>, vector<64x32xf32>
    tpu.vector_store %arg10[%c0_39, %c0_40], %135 {strides = array<i32>} : memref<64x32xf32, #tpu.memory_space<vmem>>, vector<64x32xf32>,
    %c0_41 = arith.constant 0 : index
    %c0_42 = arith.constant 0 : index
    %137 = vector.load %arg11[%c0_41, %c0_42] : memref<64x1xf32, #tpu.memory_space<vmem>>, vector<64x1xf32>
    tpu.vector_store %arg11[%c0_41, %c0_42], %132 {strides = array<i32>} : memref<64x1xf32, #tpu.memory_space<vmem>>, vector<64x1xf32>,
    return
  }
  func.func @transform_0(%arg0: i32) -> (i32, i32) {
    %c0_i32 = arith.constant 0 : i32
    %c0_i32_0 = arith.constant 0 : i32
    return %arg0, %c0_i32 : i32, i32
  }
  func.func @transform_1(%arg0: i32) -> (i32, i32) {
    %c0_i32 = arith.constant 0 : i32
    %c0_i32_0 = arith.constant 0 : i32
    return %arg0, %c0_i32 : i32, i32
  }
  func.func @transform_2(%arg0: i32) -> (i32, i32) {
    %c0_i32 = arith.constant 0 : i32
    %c0_i32_0 = arith.constant 0 : i32
    return %arg0, %c0_i32 : i32, i32
  }
  func.func @transform_3(%arg0: i32) -> (i32, i32) {
    %c0_i32 = arith.constant 0 : i32
    %c0_i32_0 = arith.constant 0 : i32
    return %arg0, %c0_i32 : i32, i32
  }
  func.func @transform_4(%arg0: i32) -> (i32, i32) {
    %c0_i32 = arith.constant 0 : i32
    %c0_i32_0 = arith.constant 0 : i32
    %c0_i32_1 = arith.constant 0 : i32
    return %c0_i32, %c0_i32_0 : i32, i32
  }
  func.func @transform_5(%arg0: i32) -> (i32, i32) {
    %c0_i32 = arith.constant 0 : i32
    %c0_i32_0 = arith.constant 0 : i32
    %c0_i32_1 = arith.constant 0 : i32
    return %c0_i32, %c0_i32_0 : i32, i32
  }
  func.func @transform_6(%arg0: i32) -> (i32, i32) {
    %c0_i32 = arith.constant 0 : i32
    %c0_i32_0 = arith.constant 0 : i32
    %c0_i32_1 = arith.constant 0 : i32
    return %c0_i32, %c0_i32_0 : i32, i32
  }
  func.func @transform_7(%arg0: i32) -> (i32, i32) {
    %c0_i32 = arith.constant 0 : i32
    %c0_i32_0 = arith.constant 0 : i32
    %c0_i32_1 = arith.constant 0 : i32
    return %c0_i32, %c0_i32_0 : i32, i32
  }
  func.func @transform_8(%arg0: i32) -> (i32, i32) {
    %c0_i32 = arith.constant 0 : i32
    %c0_i32_0 = arith.constant 0 : i32
    %c0_i32_1 = arith.constant 0 : i32
    return %c0_i32, %c0_i32_0 : i32, i32
  }
  func.func @transform_9(%arg0: i32) -> (i32, i32) {
    %c0_i32 = arith.constant 0 : i32
    %c0_i32_0 = arith.constant 0 : i32
    return %arg0, %c0_i32 : i32, i32
  }
  func.func @transform_10(%arg0: i32) -> (i32, i32) {
    %c0_i32 = arith.constant 0 : i32
    %c0_i32_0 = arith.constant 0 : i32
    return %arg0, %c0_i32 : i32, i32
  }
}

</mosaic_0001>

<llo_original>
// kernel: conv_pool_block.1
$region0: #{conv_pool_block.1}
  #allocation0 [shape = 'u32[]', space=smem, size = 0x4, offset = 0x4, fixed_abs, tag = 'smem constant byte address 0x4 - core index']
  #allocation1 [shape = 'u32[144,128]{1,0:T(1,128)}', space=vmem, size = 0x12000, scoped, tag = 'internal scratch']
  %s0 = inlined_call_operand.vmem [shape: bf16[128,32], index: 0, kind: input, shape index: {}]
  %s1 = inlined_call_operand.vmem [shape: f32[128,64], index: 1, kind: input, shape index: {}]
  %s2 = inlined_call_operand.vmem [shape: f32[128,64], index: 2, kind: input, shape index: {}]
  %s3 = inlined_call_operand.vmem [shape: bf16[128,512], index: 3, kind: input, shape index: {}]
  %s4 = inlined_call_operand.vmem [shape: bf16[32,32], index: 4, kind: input, shape index: {}]
  %s5 = inlined_call_operand.vmem [shape: bf16[32,4], index: 5, kind: input, shape index: {}]
  %s6 = inlined_call_operand.vmem [shape: bf16[4,32], index: 6, kind: input, shape index: {}]
  %s7 = inlined_call_operand.vmem [shape: bf16[512,64], index: 7, kind: input, shape index: {}]
  %s8 = inlined_call_operand.vmem [shape: f32[1,32], index: 8, kind: input, shape index: {}]
  %s9 = inlined_call_operand.vmem [shape: f32[128,32], index: 9, kind: output, shape index: {0}]
  %s10 = inlined_call_operand.vmem [shape: f32[128,1], index: 10, kind: output, shape index: {1}]
  %11 = xla_tuple %s9, %s10
  %s12 = sld [smem:[#allocation0]]
  $region77: #{conv_pool_block.1} parent=0
    _
  %s14 = ssub.s32 1, %s12
  %s15 = scalar_select 0, %s14, %s12
  loop: start=0, step=1, limit=4
  $region2: #{conv_pool_block.1} parent=0 // loop_pre_header
    _
  $region3: #{conv_pool_block.1} parent=0 // loop_header
    %s17 = sphi 0, %s21
    %p18 = scmp.ge.s32.totalorder %s17, 4
    %s27 = sphi 0, %s29
    %s30 = sphi 0, %s27
    %s31 = sphi 0, %s30
    %s47 = sphi 0, %s31
    %s53 = sphi 0, %s55
    %s56 = sphi 0, %s53
    %s57 = sphi 0, %s56
    %s73 = sphi 0, %s57
    %s79 = sphi 0, %s81
    %s82 = sphi 0, %s79
    %s83 = sphi 0, %s82
    %s99 = sphi 0, %s83
    %s105 = sphi 0, %s107
    %s108 = sphi 0, %s105
    %s109 = sphi 0, %s108
    %s125 = sphi 0, %s109
    %s129 = sphi 0, %s129
    %s131 = sphi 0, %s129
    %s132 = sphi 0, %s131
    %s146 = sphi 0, %s132
    %s150 = sphi 0, %s150
    %s152 = sphi 0, %s150
    %s153 = sphi 0, %s152
    %s167 = sphi 0, %s153
    %s171 = sphi 0, %s171
    %s173 = sphi 0, %s171
    %s174 = sphi 0, %s173
    %s188 = sphi 0, %s174
    %s192 = sphi 0, %s192
    %s194 = sphi 0, %s192
    %s195 = sphi 0, %s194
    %s209 = sphi 0, %s195
    %s213 = sphi 0, %s213
    %s215 = sphi 0, %s213
    %s216 = sphi 0, %s215
    %s230 = sphi 0, %s216
    %s236 = sphi 0, %s238
    %s239 = sphi 0, %s236
    %s240 = sphi 0, %s239
    %s256 = sphi 0, %s240
    %s262 = sphi 0, %s264
    %s265 = sphi 0, %s262
    %s266 = sphi 0, %s265
    %s282 = sphi 0, %s266
  $region4: #{conv_pool_block.1} parent=0 // loop_header_branch
    %20 = sbr.rel (%p18) target = $region8
  $region5: #{conv_pool_block.1} parent=0 // loop_body
    %s22 = ssub.s32 %s17, 1
    %s23 = ssub.s32 %s17, 2
    %s24 = sadd.s32 %s17, 1
    %s25 = ssub.s32 %s17, %s24
    %p26 = scmp.eq.s32.totalorder %s25, 0
    %s28 = sadd.s32 %s27, 1
    %s29 = scalar_select %p26, %s27, %s28
    %p32 = pneg %p26
    %p33 = scmp.eq.s32.totalorder %s17, 1
    %p34 = por %p32, %p33
    %p35 = scmp.ne.s32.totalorder %s27, %s30
    %p36 = scmp.eq.s32.totalorder %s17, 0
    %p37 = por %p35, %p36
    %p38 = scmp.ne.s32.totalorder %s27, %s30
    %p39 = scmp.eq.s32.totalorder %s22, 1
    %p40 = por %p38, %p39
    %p41 = scmp.ne.s32.totalorder %s30, %s31
    %p42 = scmp.eq.s32.totalorder %s22, 0
    %p43 = por %p41, %p42
    %p44 = scmp.ne.s32.totalorder %s30, %s31
    %p45 = scmp.eq.s32.totalorder %s23, 1
    %p46 = por %p44, %p45
    %p48 = scmp.ne.s32.totalorder %s31, %s47
    %p49 = scmp.eq.s32.totalorder %s23, 0
    %p50 = por %p48, %p49
    %s51 = ssub.s32 %s17, %s24
    %p52 = scmp.eq.s32.totalorder %s51, 0
    %s54 = sadd.s32 %s53, 1
    %s55 = scalar_select %p52, %s53, %s54
    %p58 = pneg %p52
    %p59 = scmp.eq.s32.totalorder %s17, 1
    %p60 = por %p58, %p59
    %p61 = scmp.ne.s32.totalorder %s53, %s56
    %p62 = scmp.eq.s32.totalorder %s17, 0
    %p63 = por %p61, %p62
    %p64 = scmp.ne.s32.totalorder %s53, %s56
    %p65 = scmp.eq.s32.totalorder %s22, 1
    %p66 = por %p64, %p65
    %p67 = scmp.ne.s32.totalorder %s56, %s57
    %p68 = scmp.eq.s32.totalorder %s22, 0
    %p69 = por %p67, %p68
    %p70 = scmp.ne.s32.totalorder %s56, %s57
    %p71 = scmp.eq.s32.totalorder %s23, 1
    %p72 = por %p70, %p71
    %p74 = scmp.ne.s32.totalorder %s57, %s73
    %p75 = scmp.eq.s32.totalorder %s23, 0
    %p76 = por %p74, %p75
    %s77 = ssub.s32 %s17, %s24
    %p78 = scmp.eq.s32.totalorder %s77, 0
    %s80 = sadd.s32 %s79, 1
    %s81 = scalar_select %p78, %s79, %s80
    %p84 = pneg %p78
    %p85 = scmp.eq.s32.totalorder %s17, 1
    %p86 = por %p84, %p85
    %p87 = scmp.ne.s32.totalorder %s79, %s82
    %p88 = scmp.eq.s32.totalorder %s17, 0
    %p89 = por %p87, %p88
    %p90 = scmp.ne.s32.totalorder %s79, %s82
    %p91 = scmp.eq.s32.totalorder %s22, 1
    %p92 = por %p90, %p91
    %p93 = scmp.ne.s32.totalorder %s82, %s83
    %p94 = scmp.eq.s32.totalorder %s22, 0
    %p95 = por %p93, %p94
    %p96 = scmp.ne.s32.totalorder %s82, %s83
    %p97 = scmp.eq.s32.totalorder %s23, 1
    %p98 = por %p96, %p97
    %p100 = scmp.ne.s32.totalorder %s83, %s99
    %p101 = scmp.eq.s32.totalorder %s23, 0
    %p102 = por %p100, %p101
    %s103 = ssub.s32 %s17, %s24
    %p104 = scmp.eq.s32.totalorder %s103, 0
    %s106 = sadd.s32 %s105, 1
    %s107 = scalar_select %p104, %s105, %s106
    %p110 = pneg %p104
    %p111 = scmp.eq.s32.totalorder %s17, 1
    %p112 = por %p110, %p111
    %p113 = scmp.ne.s32.totalorder %s105, %s108
    %p114 = scmp.eq.s32.totalorder %s17, 0
    %p115 = por %p113, %p114
    %p116 = scmp.ne.s32.totalorder %s105, %s108
    %p117 = scmp.eq.s32.totalorder %s22, 1
    %p118 = por %p116, %p117
    %p119 = scmp.ne.s32.totalorder %s108, %s109
    %p120 = scmp.eq.s32.totalorder %s22, 0
    %p121 = por %p119, %p120
    %p122 = scmp.ne.s32.totalorder %s108, %s109
    %p123 = scmp.eq.s32.totalorder %s23, 1
    %p124 = por %p122, %p123
    %p126 = scmp.ne.s32.totalorder %s109, %s125
    %p127 = scmp.eq.s32.totalorder %s23, 0
    %p128 = por %p126, %p127
    %s130 = sadd.s32 %s129, 1
    %p133 = scmp.eq.s32.totalorder %s17, 1
    %p134 = scmp.ne.s32.totalorder %s129, %s131
    %p135 = scmp.eq.s32.totalorder %s17, 0
    %p136 = por %p134, %p135
    %p137 = scmp.ne.s32.totalorder %s129, %s131
    %p138 = scmp.eq.s32.totalorder %s22, 1
    %p139 = por %p137, %p138
    %p140 = scmp.ne.s32.totalorder %s131, %s132
    %p141 = scmp.eq.s32.totalorder %s22, 0
    %p142 = por %p140, %p141
    %p143 = scmp.ne.s32.totalorder %s131, %s132
    %p144 = scmp.eq.s32.totalorder %s23, 1
    %p145 = por %p143, %p144
    %p147 = scmp.ne.s32.totalorder %s132, %s146
    %p148 = scmp.eq.s32.totalorder %s23, 0
    %p149 = por %p147, %p148
    %s151 = sadd.s32 %s150, 1
    %p154 = scmp.eq.s32.totalorder %s17, 1
    %p155 = scmp.ne.s32.totalorder %s150, %s152
    %p156 = scmp.eq.s32.totalorder %s17, 0
    %p157 = por %p155, %p156
    %p158 = scmp.ne.s32.totalorder %s150, %s152
    %p159 = scmp.eq.s32.totalorder %s22, 1
    %p160 = por %p158, %p159
    %p161 = scmp.ne.s32.totalorder %s152, %s153
    %p162 = scmp.eq.s32.totalorder %s22, 0
    %p163 = por %p161, %p162
    %p164 = scmp.ne.s32.totalorder %s152, %s153
    %p165 = scmp.eq.s32.totalorder %s23, 1
    %p166 = por %p164, %p165
    %p168 = scmp.ne.s32.totalorder %s153, %s167
    %p169 = scmp.eq.s32.totalorder %s23, 0
    %p170 = por %p168, %p169
    %s172 = sadd.s32 %s171, 1
    %p175 = scmp.eq.s32.totalorder %s17, 1
    %p176 = scmp.ne.s32.totalorder %s171, %s173
    %p177 = scmp.eq.s32.totalorder %s17, 0
    %p178 = por %p176, %p177
    %p179 = scmp.ne.s32.totalorder %s171, %s173
    %p180 = scmp.eq.s32.totalorder %s22, 1
    %p181 = por %p179, %p180
    %p182 = scmp.ne.s32.totalorder %s173, %s174
    %p183 = scmp.eq.s32.totalorder %s22, 0
    %p184 = por %p182, %p183
    %p185 = scmp.ne.s32.totalorder %s173, %s174
    %p186 = scmp.eq.s32.totalorder %s23, 1
    %p187 = por %p185, %p186
    %p189 = scmp.ne.s32.totalorder %s174, %s188
    %p190 = scmp.eq.s32.totalorder %s23, 0
    %p191 = por %p189, %p190
    %s193 = sadd.s32 %s192, 1
    %p196 = scmp.eq.s32.totalorder %s17, 1
    %p197 = scmp.ne.s32.totalorder %s192, %s194
    %p198 = scmp.eq.s32.totalorder %s17, 0
    %p199 = por %p197, %p198
    %p200 = scmp.ne.s32.totalorder %s192, %s194
    %p201 = scmp.eq.s32.totalorder %s22, 1
    %p202 = por %p200, %p201
    %p203 = scmp.ne.s32.totalorder %s194, %s195
    %p204 = scmp.eq.s32.totalorder %s22, 0
    %p205 = por %p203, %p204
    %p206 = scmp.ne.s32.totalorder %s194, %s195
    %p207 = scmp.eq.s32.totalorder %s23, 1
    %p208 = por %p206, %p207
    %p210 = scmp.ne.s32.totalorder %s195, %s209
    %p211 = scmp.eq.s32.totalorder %s23, 0
    %p212 = por %p210, %p211
    %s214 = sadd.s32 %s213, 1
    %p217 = scmp.eq.s32.totalorder %s17, 1
    %p218 = scmp.ne.s32.totalorder %s213, %s215
    %p219 = scmp.eq.s32.totalorder %s17, 0
    %p220 = por %p218, %p219
    %p221 = scmp.ne.s32.totalorder %s213, %s215
    %p222 = scmp.eq.s32.totalorder %s22, 1
    %p223 = por %p221, %p222
    %p224 = scmp.ne.s32.totalorder %s215, %s216
    %p225 = scmp.eq.s32.totalorder %s22, 0
    %p226 = por %p224, %p225
    %p227 = scmp.ne.s32.totalorder %s215, %s216
    %p228 = scmp.eq.s32.totalorder %s23, 1
    %p229 = por %p227, %p228
    %p231 = scmp.ne.s32.totalorder %s216, %s230
    %p232 = scmp.eq.s32.totalorder %s23, 0
    %p233 = por %p231, %p232
    %s234 = ssub.s32 %s17, %s24
    %p235 = scmp.eq.s32.totalorder %s234, 0
    %s237 = sadd.s32 %s236, 1
    %s238 = scalar_select %p235, %s236, %s237
    %p241 = pneg %p235
    %p242 = scmp.eq.s32.totalorder %s17, 1
    %p243 = por %p241, %p242
    %p244 = scmp.ne.s32.totalorder %s236, %s239
    %p245 = scmp.eq.s32.totalorder %s17, 0
    %p246 = por %p244, %p245
    %p247 = scmp.ne.s32.totalorder %s236, %s239
    %p248 = scmp.eq.s32.totalorder %s22, 1
    %p249 = por %p247, %p248
    %p250 = scmp.ne.s32.totalorder %s239, %s240
    %p251 = scmp.eq.s32.totalorder %s22, 0
    %p252 = por %p250, %p251
    %p253 = scmp.ne.s32.totalorder %s239, %s240
    %p254 = scmp.eq.s32.totalorder %s23, 1
    %p255 = por %p253, %p254
    %p257 = scmp.ne.s32.totalorder %s240, %s256
    %p258 = scmp.eq.s32.totalorder %s23, 0
    %p259 = por %p257, %p258
    %s260 = ssub.s32 %s17, %s24
    %p261 = scmp.eq.s32.totalorder %s260, 0
    %s263 = sadd.s32 %s262, 1
    %s264 = scalar_select %p261, %s262, %s263
    %p267 = pneg %p261
    %p268 = scmp.eq.s32.totalorder %s17, 1
    %p269 = por %p267, %p268
    %p270 = scmp.ne.s32.totalorder %s262, %s265
    %p271 = scmp.eq.s32.totalorder %s17, 0
    %p272 = por %p270, %p271
    %p273 = scmp.ne.s32.totalorder %s262, %s265
    %p274 = scmp.eq.s32.totalorder %s22, 1
    %p275 = por %p273, %p274
    %p276 = scmp.ne.s32.totalorder %s265, %s266
    %p277 = scmp.eq.s32.totalorder %s22, 0
    %p278 = por %p276, %p277
    %p279 = scmp.ne.s32.totalorder %s265, %s266
    %p280 = scmp.eq.s32.totalorder %s23, 1
    %p281 = por %p279, %p280
    %p283 = scmp.ne.s32.totalorder %s266, %s282
    %p284 = scmp.eq.s32.totalorder %s23, 0
    %p285 = por %p283, %p284
    %p286 = scmp.le.s32.totalorder 1, %s17
    %p287 = scmp.lt.s32.totalorder %s17, 3
    %p288 = pnand %p286, %p287
    %p289 = pneg %p288
    // Predicated region
    $region9: #{conv_pool_block.1} parent=5 // pred_check
      _
    $region10: #{conv_pool_block.1} parent=5 // pred_check_branch
      %291 = sbr.rel (%p288) target = $region12
    $region11: #{conv_pool_block.1} parent=5 // pred_region
      %s292 = ssub.s32 %s17, 1
      // Predicated region
      $region13: #{conv_pool_block.1} parent=11 // pred_check
        %p293 = pneg %p142
      $region14: #{conv_pool_block.1} parent=11 // pred_check_branch
        %295 = sbr.rel (%p293) target = $region16
      $region15: #{conv_pool_block.1} parent=11 // pred_region
        _
      $region16: #{conv_pool_block.1} parent=11 // pred_fallthru
        _
      // Predicated region
      $region17: #{conv_pool_block.1} parent=11 // pred_check
        %p296 = pneg %p163
      $region18: #{conv_pool_block.1} parent=11 // pred_check_branch
        %298 = sbr.rel (%p296) target = $region20
      $region19: #{conv_pool_block.1} parent=11 // pred_region
        _
      $region20: #{conv_pool_block.1} parent=11 // pred_fallthru
        _
      // Predicated region
      $region21: #{conv_pool_block.1} parent=11 // pred_check
        %p299 = pneg %p184
      $region22: #{conv_pool_block.1} parent=11 // pred_check_branch
        %301 = sbr.rel (%p299) target = $region24
      $region23: #{conv_pool_block.1} parent=11 // pred_region
        _
      $region24: #{conv_pool_block.1} parent=11 // pred_fallthru
        _
      // Predicated region
      $region25: #{conv_pool_block.1} parent=11 // pred_check
        %p302 = pneg %p205
      $region26: #{conv_pool_block.1} parent=11 // pred_check_branch
        %304 = sbr.rel (%p302) target = $region28
      $region27: #{conv_pool_block.1} parent=11 // pred_region
        _
      $region28: #{conv_pool_block.1} parent=11 // pred_fallthru
        _
      // Predicated region
      $region29: #{conv_pool_block.1} parent=11 // pred_check
        %p305 = pneg %p226
      $region30: #{conv_pool_block.1} parent=11 // pred_check_branch
        %307 = sbr.rel (%p305) target = $region32
      $region31: #{conv_pool_block.1} parent=11 // pred_region
        _
      $region32: #{conv_pool_block.1} parent=11 // pred_fallthru
        _
    $region12: #{conv_pool_block.1} parent=5 // pred_fallthru
      _
    %p308 = scmp.lt.s32.totalorder %s17, 2
    // Predicated region
    $region33: #{conv_pool_block.1} parent=5 // pred_check
      %p309 = pneg %p308
    $region34: #{conv_pool_block.1} parent=5 // pred_check_branch
      %311 = sbr.rel (%p309) target = $region36
    $region35: #{conv_pool_block.1} parent=5 // pred_region
      // Predicated region
      $region37: #{conv_pool_block.1} parent=35 // pred_check
        %p312 = pneg %p37
      $region38: #{conv_pool_block.1} parent=35 // pred_check_branch
        %314 = sbr.rel (%p312) target = $region40
      $region39: #{conv_pool_block.1} parent=35 // pred_region
        %s315 = smul.u32 8, %s17
        %p316 = scmp.lt.s32.totalorder %s315, 15
        %s317 = scalar_select %p316, %s315, 15
        %s318 = smul.addr %s317, 4
        %s319 = scalar_lea.vmem %s0, %s318
        %s320 = smul.u32 8, %s17
      $region40: #{conv_pool_block.1} parent=35 // pred_fallthru
        _
      // Predicated region
      $region41: #{conv_pool_block.1} parent=35 // pred_check
        %p321 = pneg %p63
      $region42: #{conv_pool_block.1} parent=35 // pred_check_branch
        %323 = sbr.rel (%p321) target = $region44
      $region43: #{conv_pool_block.1} parent=35 // pred_region
        %s324 = smul.u32 8, %s17
        %p325 = scmp.lt.s32.totalorder %s324, 15
        %s326 = scalar_select %p325, %s324, 15
        %s327 = smul.addr %s326, 8
        %s328 = scalar_lea.vmem %s1, %s327
        %s329 = smul.u32 8, %s17
      $region44: #{conv_pool_block.1} parent=35 // pred_fallthru
        _
      // Predicated region
      $region45: #{conv_pool_block.1} parent=35 // pred_check
        %p330 = pneg %p89
      $region46: #{conv_pool_block.1} parent=35 // pred_check_branch
        %332 = sbr.rel (%p330) target = $region48
      $region47: #{conv_pool_block.1} parent=35 // pred_region
        %s333 = smul.u32 8, %s17
        %p334 = scmp.lt.s32.totalorder %s333, 15
        %s335 = scalar_select %p334, %s333, 15
        %s336 = smul.addr %s335, 8
        %s337 = scalar_lea.vmem %s2, %s336
        %s338 = smul.u32 8, %s17
      $region48: #{conv_pool_block.1} parent=35 // pred_fallthru
        _
      // Predicated region
      $region49: #{conv_pool_block.1} parent=35 // pred_check
        %p339 = pneg %p115
      $region50: #{conv_pool_block.1} parent=35 // pred_check_branch
        %341 = sbr.rel (%p339) target = $region52
      $region51: #{conv_pool_block.1} parent=35 // pred_region
        %s342 = smul.u32 8, %s17
        %p343 = scmp.lt.s32.totalorder %s342, 15
        %s344 = scalar_select %p343, %s342, 15
        %s345 = smul.addr %s344, 4
        %s346 = smul.addr %s345, 4
        %s347 = scalar_lea.vmem %s3, %s346
        %s348 = smul.u32 8, %s17
      $region52: #{conv_pool_block.1} parent=35 // pred_fallthru
        _
    $region36: #{conv_pool_block.1} parent=5 // pred_fallthru
      _
    %p349 = scmp.le.s32.totalorder 1, %s17
    %p350 = scmp.lt.s32.totalorder %s17, 3
    %p351 = pnand %p349, %p350
    %p352 = pneg %p351
    // Predicated region
    $region53: #{conv_pool_block.1} parent=5 // pred_check
      _
    $region54: #{conv_pool_block.1} parent=5 // pred_check_branch
      %354 = sbr.rel (%p351) target = $region56
    $region55: #{conv_pool_block.1} parent=5 // pred_region
      %s355 = ssub.s32 %s17, 1
      %s356 = smul.u32 8, %s22
      %p357 = scmp.lt.s32.totalorder %s356, 15
      %s358 = scalar_select %p357, %s356, 15
      %s359 = smul.addr %s358, 4
      %s360 = scalar_lea.vmem %s0, %s359
      %p361 = pneg %p43
      %p362 = pneg %p40
      %s363 = smul.u32 8, %s22
      %p364 = scmp.lt.s32.totalorder %s363, 15
      %s365 = scalar_select %p364, %s363, 15
      %s366 = smul.addr %s365, 8
      %s367 = scalar_lea.vmem %s1, %s366
      %p368 = pneg %p69
      %p369 = pneg %p66
      %s370 = smul.u32 8, %s22
      %p371 = scmp.lt.s32.totalorder %s370, 15
      %s372 = scalar_select %p371, %s370, 15
      %s373 = smul.addr %s372, 8
      %s374 = scalar_lea.vmem %s2, %s373
      %p375 = pneg %p95
      %p376 = pneg %p92
      %s377 = smul.u32 8, %s22
      %p378 = scmp.lt.s32.totalorder %s377, 15
      %s379 = scalar_select %p378, %s377, 15
      %s380 = smul.addr %s379, 4
      %s381 = smul.addr %s380, 4
      %s382 = scalar_lea.vmem %s3, %s381
      %p383 = pneg %p121
      %p384 = pneg %p118
      %p385 = pneg %p142
      %p386 = pneg %p139
      %p387 = pneg %p163
      %p388 = pneg %p160
      %p389 = pneg %p184
      %p390 = pneg %p181
      %p391 = pneg %p205
      %p392 = pneg %p202
      %p393 = pneg %p226
      %p394 = pneg %p223
      %p395 = pneg %p252
      %p396 = pneg %p249
      %s397 = smul.u32 8, %s22
      %p398 = scmp.lt.s32.totalorder %s397, 15
      %s399 = scalar_select %p398, %s397, 15
      %s400 = smul.addr %s399, 8
      %s401 = scalar_lea.vmem %s9, %s400
      %p402 = pneg %p278
      %p403 = pneg %p275
      %s404 = smul.u32 8, %s22
      %p405 = scmp.lt.s32.totalorder %s404, 15
      %s406 = scalar_select %p405, %s404, 15
      %s407 = smul.addr %s406, 8
      %s408 = scalar_lea.vmem %s10, %s407
      %s409 = smul.u32 8, %s22
      %p410 = scmp.lt.s32.totalorder %s409, 15
      %s411 = scalar_select %p410, %s409, 15
      %s412 = smul.addr %s411, 4
      %s413 = scalar_lea.vmem %s0, %s412
      %s414 = smul.u32 8, %s22
      %s415 = smul.u32 8, %s22
      %p416 = scmp.lt.s32.totalorder %s415, 15
      %s417 = scalar_select %p416, %s415, 15
      %s418 = smul.addr %s417, 8
      %s419 = scalar_lea.vmem %s1, %s418
      %s420 = smul.u32 8, %s22
      %s421 = smul.u32 8, %s22
      %p422 = scmp.lt.s32.totalorder %s421, 15
      %s423 = scalar_select %p422, %s421, 15
      %s424 = smul.addr %s423, 8
      %s425 = scalar_lea.vmem %s2, %s424
      %s426 = smul.u32 8, %s22
      %s427 = smul.u32 8, %s22
      %p428 = scmp.lt.s32.totalorder %s427, 15
      %s429 = scalar_select %p428, %s427, 15
      %s430 = smul.addr %s429, 4
      %s431 = smul.addr %s430, 4
      %s432 = scalar_lea.vmem %s3, %s431
      %s433 = smul.u32 8, %s22
      %s434 = smul.u32 8, %s22
      %p435 = scmp.lt.s32.totalorder %s434, 15
      %s436 = scalar_select %p435, %s434, 15
      %s437 = smul.addr %s436, 8
      %s438 = scalar_lea.vmem %s9, %s437
      %s439 = smul.u32 8, %s22
      %s440 = smul.u32 8, %s22
      %p441 = scmp.lt.s32.totalorder %s440, 15
      %s442 = scalar_select %p441, %s440, 15
      %s443 = smul.addr %s442, 8
      %s444 = scalar_lea.vmem %s10, %s443
      %s445 = smul.u32 8, %s22
      %v447 = vld [vmem:[%s413] sm:$0xf]
      %v448 = vld [vmem:[%s413 + $0x4] sm:$0xf]
      %v449 = vld [vmem:[%s413 + $0x8] sm:$0xf]
      %v450 = vld [vmem:[%s413 + $0xc] sm:$0xf]
      %v451 = vld [vmem:[%s413 + $0x10] sm:$0xf]
      %v452 = vld [vmem:[%s413 + $0x14] sm:$0xf]
      %v453 = vld [vmem:[%s413 + $0x18] sm:$0xf]
      %v454 = vld [vmem:[%s413 + $0x1c] sm:$0xf]
      %v455 = vld [vmem:[%s4] sm:$0xf]
      %v456 = vld [vmem:[%s4 + $0x4] sm:$0xf]
      %v457 = vld [vmem:[%s4 + $0x8] sm:$0xf]
      %v458 = vld [vmem:[%s4 + $0xc] sm:$0xf]
      %v467 = vunpack.c.l.b16 %v447
      %v468 = vunpack.c.l.b16 %v448
      %v469 = vunpack.c.l.b16 %v449
      %v470 = vunpack.c.l.b16 %v450
      %v471 = vunpack.c.l.b16 %v451
      %v472 = vunpack.c.l.b16 %v452
      %v473 = vunpack.c.l.b16 %v453
      %v474 = vunpack.c.l.b16 %v454
      %v475 = vpack.c.b16 %v468, %v467
      %v476 = vpack.c.b16 %v470, %v469
      %v477 = vpack.c.b16 %v472, %v471
      %v478 = vpack.c.b16 %v474, %v473
      %v483 = vunpack.c.l.b16 %v455
      %v484 = vunpack.c.l.b16 %v456
      %v485 = vunpack.c.l.b16 %v457
      %v486 = vunpack.c.l.b16 %v458
      %v487 = vpack.c.b16 %v484, %v483
      %v488 = vpack.c.b16 %v486, %v485
      %vm491 = vcmask 261120
      %v493 = vsel %vm491, %v475, 0
      %v496 = vsel %vm491, %v476, 0
      %v499 = vsel %vm491, %v477, 0
      %v502 = vsel %vm491, %v478, 0
      %504 = vmatprep.subr.bf16.mxu0 0
      %505 = vmatpush1.bf16.msra.mxu0 %v487
      %506 = vmatprep.subr.bf16.mxu0 0
      %507 = vmatpush1.bf16.msra.mxu0 %v488
      %508 = vmatprep.subr.bf16.mxu0 0
      %509 = vmatpush1.bf16.msra.mxu0 0
      %510 = vmatprep.subr.bf16.mxu0 0
      %511 = vmatpush1.bf16.msra.mxu0 0
      %512 = vmatprep.subr.bf16.mxu0 0
      %513 = vmatpush1.bf16.msra.mxu0 0
      %514 = vmatprep.subr.bf16.mxu0 0
      %515 = vmatpush1.bf16.msra.mxu0 0
      %516 = vmatprep.subr.bf16.mxu0 0
      %517 = vmatpush1.bf16.msra.mxu0 0
      %518 = vmatprep.subr.bf16.mxu0 0
      %519 = vmatpush1.bf16.msra.mxu0 0
      %520 = vmatprep.subr.bf16.mxu0 0
      %521 = vmatpush1.bf16.msra.mxu0 0
      %522 = vmatprep.subr.bf16.mxu0 0
      %523 = vmatpush1.bf16.msra.mxu0 0
      %524 = vmatprep.subr.bf16.mxu0 0
      %525 = vmatpush1.bf16.msra.mxu0 0
      %526 = vmatprep.subr.bf16.mxu0 0
      %527 = vmatpush1.bf16.msra.mxu0 0
      %528 = vmatprep.subr.bf16.mxu0 0
      %529 = vmatpush1.bf16.msra.mxu0 0
      %530 = vmatprep.subr.bf16.mxu0 0
      %531 = vmatpush1.bf16.msra.mxu0 0
      %532 = vmatprep.subr.bf16.mxu0 0
      %533 = vmatpush1.bf16.msra.mxu0 0
      %534 = vmatprep.subr.bf16.mxu0 0
      %535 = vmatpush1.bf16.msra.mxu0 0
      %536 = vmatprep.mubr.bf16.mxu0 0
      %537 = vmatmul.mubr.bf16.gmra.mrb[0].mxu0 %v493
      %v538 = vpop.f32.mrb[0].mxu0
      %v539 = vadd.f32 0.0, %v538
      %v540 = vpop.f32.mrb[0].mxu0
      %v541 = vpop.f32.mrb[0].mxu0
      %v542 = vadd.f32 0.0, %v541
      %v543 = vpop.f32.mrb[0].mxu0
      %544 = vmatprep.mubr.bf16.mxu0 0
      %545 = vmatmul.mubr.bf16.gmra.mrb[0].mxu0 %v496
      %v546 = vpop.f32.mrb[0].mxu0
      %v547 = vadd.f32 0.0, %v546
      %v548 = vpop.f32.mrb[0].mxu0
      %v549 = vpop.f32.mrb[0].mxu0
      %v550 = vadd.f32 0.0, %v549
      %v551 = vpop.f32.mrb[0].mxu0
      %552 = vmatprep.mubr.bf16.mxu0 0
      %553 = vmatmul.mubr.bf16.gmra.mrb[0].mxu0 %v499
      %v554 = vpop.f32.mrb[0].mxu0
      %v555 = vadd.f32 0.0, %v554
      %v556 = vpop.f32.mrb[0].mxu0
      %v557 = vpop.f32.mrb[0].mxu0
      %v558 = vadd.f32 0.0, %v557
      %v559 = vpop.f32.mrb[0].mxu0
      %560 = vmatprep.mubr.bf16.mxu0 0
      %561 = vmatmul.mubr.bf16.gmra.mrb[0].mxu0 %v502
      %v562 = vpop.f32.mrb[0].mxu0
      %v563 = vadd.f32 0.0, %v562
      %v564 = vpop.f32.mrb[0].mxu0
      %v565 = vpop.f32.mrb[0].mxu0
      %v566 = vadd.f32 0.0, %v565
      %v567 = vpop.f32.mrb[0].mxu0
      %568 = vdwg.mxu0
      %v569 = vpack.c.bf16 %v542, %v539
      %v570 = vpack.c.bf16 %v550, %v547
      %v571 = vpack.c.bf16 %v558, %v555
      %v572 = vpack.c.bf16 %v566, %v563
      %v573 = vld [vmem:[%s5] sm:$0xf]
      %v574 = vld [vmem:[%s5 + $0x4] sm:$0xf]
      %v575 = vld [vmem:[%s5 + $0x8] sm:$0xf]
      %v576 = vld [vmem:[%s5 + $0xc] sm:$0xf]
      %v581 = vunpack.c.l.b16 %v573
      %v582 = vunpack.c.l.b16 %v574
      %v583 = vunpack.c.l.b16 %v575
      %v584 = vunpack.c.l.b16 %v576
      %v585 = vpack.c.b16 %v582, %v581
      %v586 = vpack.c.b16 %v584, %v583
      %v590 = vsel %vm491, %v569, 0
      %v593 = vsel %vm491, %v570, 0
      %v596 = vsel %vm491, %v571, 0
      %v599 = vsel %vm491, %v572, 0
      %601 = vmatprep.subr.bf16.mxu0 0
      %602 = vmatpush1.bf16.msra.mxu0 %v585
      %603 = vmatprep.subr.bf16.mxu0 0
      %604 = vmatpush1.bf16.msra.mxu0 %v586
      %605 = vmatprep.subr.bf16.mxu0 0
      %606 = vmatpush1.bf16.msra.mxu0 0
      %607 = vmatprep.subr.bf16.mxu0 0
      %608 = vmatpush1.bf16.msra.mxu0 0
      %609 = vmatprep.subr.bf16.mxu0 0
      %610 = vmatpush1.bf16.msra.mxu0 0
      %611 = vmatprep.subr.bf16.mxu0 0
      %612 = vmatpush1.bf16.msra.mxu0 0
      %613 = vmatprep.subr.bf16.mxu0 0
      %614 = vmatpush1.bf16.msra.mxu0 0
      %615 = vmatprep.subr.bf16.mxu0 0
      %616 = vmatpush1.bf16.msra.mxu0 0
      %617 = vmatprep.subr.bf16.mxu0 0
      %618 = vmatpush1.bf16.msra.mxu0 0
      %619 = vmatprep.subr.bf16.mxu0 0
      %620 = vmatpush1.bf16.msra.mxu0 0
      %621 = vmatprep.subr.bf16.mxu0 0
      %622 = vmatpush1.bf16.msra.mxu0 0
      %623 = vmatprep.subr.bf16.mxu0 0
      %624 = vmatpush1.bf16.msra.mxu0 0
      %625 = vmatprep.subr.bf16.mxu0 0
      %626 = vmatpush1.bf16.msra.mxu0 0
      %627 = vmatprep.subr.bf16.mxu0 0
      %628 = vmatpush1.bf16.msra.mxu0 0
      %629 = vmatprep.subr.bf16.mxu0 0
      %630 = vmatpush1.bf16.msra.mxu0 0
      %631 = vmatprep.subr.bf16.mxu0 0
      %632 = vmatpush1.bf16.msra.mxu0 0
      %633 = vmatprep.mubr.bf16.mxu0 0
      %634 = vmatmul.mubr.bf16.gmra.mrb[0].mxu0 %v590
      %v635 = vpop.f32.mrb[0].mxu0
      %v636 = vadd.f32 0.0, %v635
      %v637 = vpop.f32.mrb[0].mxu0
      %v638 = vpop.f32.mrb[0].mxu0
      %v639 = vadd.f32 0.0, %v638
      %v640 = vpop.f32.mrb[0].mxu0
      %641 = vmatprep.mubr.bf16.mxu0 0
      %642 = vmatmul.mubr.bf16.gmra.mrb[0].mxu0 %v593
      %v643 = vpop.f32.mrb[0].mxu0
      %v644 = vadd.f32 0.0, %v643
      %v645 = vpop.f32.mrb[0].mxu0
      %v646 = vpop.f32.mrb[0].mxu0
      %v647 = vadd.f32 0.0, %v646
      %v648 = vpop.f32.mrb[0].mxu0
      %649 = vmatprep.mubr.bf16.mxu0 0
      %650 = vmatmul.mubr.bf16.gmra.mrb[0].mxu0 %v596
      %v651 = vpop.f32.mrb[0].mxu0
      %v652 = vadd.f32 0.0, %v651
      %v653 = vpop.f32.mrb[0].mxu0
      %v654 = vpop.f32.mrb[0].mxu0
      %v655 = vadd.f32 0.0, %v654
      %v656 = vpop.f32.mrb[0].mxu0
      %657 = vmatprep.mubr.bf16.mxu0 0
      %658 = vmatmul.mubr.bf16.gmra.mrb[0].mxu0 %v599
      %v659 = vpop.f32.mrb[0].mxu0
      %v660 = vadd.f32 0.0, %v659
      %v661 = vpop.f32.mrb[0].mxu0
      %v662 = vpop.f32.mrb[0].mxu0
      %v663 = vadd.f32 0.0, %v662
      %v664 = vpop.f32.mrb[0].mxu0
      %665 = vdwg.mxu0
      %v666 = vld [vmem:[%s6] sm:$0x3]
      %v668 = vsel %vm491, %v666, 0
      %670 = vmatprep.subr.bf16.mxu0 0
      %671 = vmatpush1.bf16.xpose.msra.mxu0 %v590
      %672 = vmatprep.subr.bf16.mxu0 0
      %673 = vmatpush1.bf16.xpose.msra.mxu0 %v593
      %674 = vmatprep.subr.bf16.mxu0 0
      %675 = vmatpush1.bf16.xpose.msra.mxu0 %v596
      %676 = vmatprep.subr.bf16.mxu0 0
      %677 = vmatpush1.bf16.xpose.msra.mxu0 %v599
      %678 = vmatprep.subr.bf16.mxu0 0
      %679 = vmatpush1.bf16.xpose.msra.mxu0 0
      %680 = vmatprep.subr.bf16.mxu0 0
      %681 = vmatpush1.bf16.xpose.msra.mxu0 0
      %682 = vmatprep.subr.bf16.mxu0 0
      %683 = vmatpush1.bf16.xpose.msra.mxu0 0
      %684 = vmatprep.subr.bf16.mxu0 0
      %685 = vmatpush1.bf16.xpose.msra.mxu0 0
      %686 = vmatprep.subr.bf16.mxu0 0
      %687 = vmatpush1.bf16.xpose.msra.mxu0 0
      %688 = vmatprep.subr.bf16.mxu0 0
      %689 = vmatpush1.bf16.xpose.msra.mxu0 0
      %690 = vmatprep.subr.bf16.mxu0 0
      %691 = vmatpush1.bf16.xpose.msra.mxu0 0
      %692 = vmatprep.subr.bf16.mxu0 0
      %693 = vmatpush1.bf16.xpose.msra.mxu0 0
      %694 = vmatprep.subr.bf16.mxu0 0
      %695 = vmatpush1.bf16.xpose.msra.mxu0 0
      %696 = vmatprep.subr.bf16.mxu0 0
      %697 = vmatpush1.bf16.xpose.msra.mxu0 0
      %698 = vmatprep.subr.bf16.mxu0 0
      %699 = vmatpush1.bf16.xpose.msra.mxu0 0
      %700 = vmatprep.subr.bf16.mxu0 0
      %701 = vmatpush1.bf16.xpose.msra.mxu0 0
      %702 = vmatprep.mubr.bf16.mxu0 0
      %703 = vmatmul.mubr.bf16.gmra.mrb[0].mxu0 %v668
      %v704 = vpop.f32.mrb[0].mxu0
      %v705 = vadd.f32 0.0, %v704
      %v706 = vpop.f32.mrb[0].mxu0
      %v707 = vpop.f32.mrb[0].mxu0
      %v708 = vpop.f32.mrb[0].mxu0
      %709 = vdwg.mxu0
      %v710 = vld [vmem:[%s432] sm:$0xff]
      %v711 = vld [vmem:[%s432 + $0x8] sm:$0xff]
      %v712 = vld [vmem:[%s432 + $0x10] sm:$0xff]
      %v713 = vld [vmem:[%s432 + $0x18] sm:$0xff]
      %v714 = vld [vmem:[%s432 + $0x20] sm:$0xff]
      %v715 = vld [vmem:[%s432 + $0x28] sm:$0xff]
      %v716 = vld [vmem:[%s432 + $0x30] sm:$0xff]
      %v717 = vld [vmem:[%s432 + $0x38] sm:$0xff]
      %v718 = vld [vmem:[%s432 + $0x40] sm:$0xff]
      %v719 = vld [vmem:[%s432 + $0x48] sm:$0xff]
      %v720 = vld [vmem:[%s432 + $0x50] sm:$0xff]
      %v721 = vld [vmem:[%s432 + $0x58] sm:$0xff]
      %v722 = vld [vmem:[%s432 + $0x60] sm:$0xff]
      %v723 = vld [vmem:[%s432 + $0x68] sm:$0xff]
      %v724 = vld [vmem:[%s432 + $0x70] sm:$0xff]
      %v725 = vld [vmem:[%s432 + $0x78] sm:$0xff]
      %v726 = vld [vmem:[%s7] sm:$0xf]
      %v727 = vld [vmem:[%s7 + $0x4] sm:$0xf]
      %v728 = vld [vmem:[%s7 + $0x8] sm:$0xf]
      %v729 = vld [vmem:[%s7 + $0xc] sm:$0xf]
      %v730 = vld [vmem:[%s7 + $0x10] sm:$0xf]
      %v731 = vld [vmem:[%s7 + $0x14] sm:$0xf]
      %v732 = vld [vmem:[%s7 + $0x18] sm:$0xf]
      %v733 = vld [vmem:[%s7 + $0x1c] sm:$0xf]
      %v734 = vld [vmem:[%s7 + $0x20] sm:$0xf]
      %v735 = vld [vmem:[%s7 + $0x24] sm:$0xf]
      %v736 = vld [vmem:[%s7 + $0x28] sm:$0xf]
      %v737 = vld [vmem:[%s7 + $0x2c] sm:$0xf]
      %v738 = vld [vmem:[%s7 + $0x30] sm:$0xf]
      %v739 = vld [vmem:[%s7 + $0x34] sm:$0xf]
      %v740 = vld [vmem:[%s7 + $0x38] sm:$0xf]
      %v741 = vld [vmem:[%s7 + $0x3c] sm:$0xf]
      %v742 = vld [vmem:[%s7 + $0x40] sm:$0xf]
      %v743 = vld [vmem:[%s7 + $0x44] sm:$0xf]
      %v744 = vld [vmem:[%s7 + $0x48] sm:$0xf]
      %v745 = vld [vmem:[%s7 + $0x4c] sm:$0xf]
      %v746 = vld [vmem:[%s7 + $0x50] sm:$0xf]
      %v747 = vld [vmem:[%s7 + $0x54] sm:$0xf]
      %v748 = vld [vmem:[%s7 + $0x58] sm:$0xf]
      %v749 = vld [vmem:[%s7 + $0x5c] sm:$0xf]
      %v750 = vld [vmem:[%s7 + $0x60] sm:$0xf]
      %v751 = vld [vmem:[%s7 + $0x64] sm:$0xf]
      %v752 = vld [vmem:[%s7 + $0x68] sm:$0xf]
      %v753 = vld [vmem:[%s7 + $0x6c] sm:$0xf]
      %v754 = vld [vmem:[%s7 + $0x70] sm:$0xf]
      %v755 = vld [vmem:[%s7 + $0x74] sm:$0xf]
      %v756 = vld [vmem:[%s7 + $0x78] sm:$0xf]
      %v757 = vld [vmem:[%s7 + $0x7c] sm:$0xf]
      %v758 = vld [vmem:[%s7 + $0x80] sm:$0xf]
      %v759 = vld [vmem:[%s7 + $0x84] sm:$0xf]
      %v760 = vld [vmem:[%s7 + $0x88] sm:$0xf]
      %v761 = vld [vmem:[%s7 + $0x8c] sm:$0xf]
      %v762 = vld [vmem:[%s7 + $0x90] sm:$0xf]
      %v763 = vld [vmem:[%s7 + $0x94] sm:$0xf]
      %v764 = vld [vmem:[%s7 + $0x98] sm:$0xf]
      %v765 = vld [vmem:[%s7 + $0x9c] sm:$0xf]
      %v766 = vld [vmem:[%s7 + $0xa0] sm:$0xf]
      %v767 = vld [vmem:[%s7 + $0xa4] sm:$0xf]
      %v768 = vld [vmem:[%s7 + $0xa8] sm:$0xf]
      %v769 = vld [vmem:[%s7 + $0xac] sm:$0xf]
      %v770 = vld [vmem:[%s7 + $0xb0] sm:$0xf]
      %v771 = vld [vmem:[%s7 + $0xb4] sm:$0xf]
      %v772 = vld [vmem:[%s7 + $0xb8] sm:$0xf]
      %v773 = vld [vmem:[%s7 + $0xbc] sm:$0xf]
      %v774 = vld [vmem:[%s7 + $0xc0] sm:$0xf]
      %v775 = vld [vmem:[%s7 + $0xc4] sm:$0xf]
      %v776 = vld [vmem:[%s7 + $0xc8] sm:$0xf]
      %v777 = vld [vmem:[%s7 + $0xcc] sm:$0xf]
      %v778 = vld [vmem:[%s7 + $0xd0] sm:$0xf]
      %v779 = vld [vmem:[%s7 + $0xd4] sm:$0xf]
      %v780 = vld [vmem:[%s7 + $0xd8] sm:$0xf]
      %v781 = vld [vmem:[%s7 + $0xdc] sm:$0xf]
      %v782 = vld [vmem:[%s7 + $0xe0] sm:$0xf]
      %v783 = vld [vmem:[%s7 + $0xe4] sm:$0xf]
      %v784 = vld [vmem:[%s7 + $0xe8] sm:$0xf]
      %v785 = vld [vmem:[%s7 + $0xec] sm:$0xf]
      %v786 = vld [vmem:[%s7 + $0xf0] sm:$0xf]
      %v787 = vld [vmem:[%s7 + $0xf4] sm:$0xf]
      %v788 = vld [vmem:[%s7 + $0xf8] sm:$0xf]
      %v789 = vld [vmem:[%s7 + $0xfc] sm:$0xf]
      %v806 = vunpack.c.l.b16 %v710
      %v807 = vunpack.c.h.b16 %v710
      %v808 = vunpack.c.l.b16 %v711
      %v809 = vunpack.c.h.b16 %v711
      %v810 = vunpack.c.l.b16 %v712
      %v811 = vunpack.c.h.b16 %v712
      %v812 = vunpack.c.l.b16 %v713
      %v813 = vunpack.c.h.b16 %v713
      %v814 = vunpack.c.l.b16 %v714
      %v815 = vunpack.c.h.b16 %v714
      %v816 = vunpack.c.l.b16 %v715
      %v817 = vunpack.c.h.b16 %v715
      %v818 = vunpack.c.l.b16 %v716
      %v819 = vunpack.c.h.b16 %v716
      %v820 = vunpack.c.l.b16 %v717
      %v821 = vunpack.c.h.b16 %v717
      %v822 = vunpack.c.l.b16 %v718
      %v823 = vunpack.c.h.b16 %v718
      %v824 = vunpack.c.l.b16 %v719
      %v825 = vunpack.c.h.b16 %v719
      %v826 = vunpack.c.l.b16 %v720
      %v827 = vunpack.c.h.b16 %v720
      %v828 = vunpack.c.l.b16 %v721
      %v829 = vunpack.c.h.b16 %v721
      %v830 = vunpack.c.l.b16 %v722
      %v831 = vunpack.c.h.b16 %v722
      %v832 = vunpack.c.l.b16 %v723
      %v833 = vunpack.c.h.b16 %v723
      %v834 = vunpack.c.l.b16 %v724
      %v835 = vunpack.c.h.b16 %v724
      %v836 = vunpack.c.l.b16 %v725
      %v837 = vunpack.c.h.b16 %v725
      %v838 = vpack.c.b16 %v810, %v806
      %v839 = vpack.c.b16 %v811, %v807
      %v840 = vpack.c.b16 %v812, %v808
      %v841 = vpack.c.b16 %v813, %v809
      %v842 = vpack.c.b16 %v818, %v814
      %v843 = vpack.c.b16 %v819, %v815
      %v844 = vpack.c.b16 %v820, %v816
      %v845 = vpack.c.b16 %v821, %v817
      %v846 = vpack.c.b16 %v826, %v822
      %v847 = vpack.c.b16 %v827, %v823
      %v848 = vpack.c.b16 %v828, %v824
      %v849 = vpack.c.b16 %v829, %v825
      %v850 = vpack.c.b16 %v834, %v830
      %v851 = vpack.c.b16 %v835, %v831
      %v852 = vpack.c.b16 %v836, %v832
      %v853 = vpack.c.b16 %v837, %v833
      %v934 = vunpack.c.l.b16 %v726
      %v935 = vunpack.c.l.b16 %v727
      %v936 = vunpack.c.l.b16 %v728
      %v937 = vunpack.c.l.b16 %v729
      %v938 = vunpack.c.l.b16 %v730
      %v939 = vunpack.c.l.b16 %v731
      %v940 = vunpack.c.l.b16 %v732
      %v941 = vunpack.c.l.b16 %v733
      %v942 = vunpack.c.l.b16 %v734
      %v943 = vunpack.c.l.b16 %v735
      %v944 = vunpack.c.l.b16 %v736
      %v945 = vunpack.c.l.b16 %v737
      %v946 = vunpack.c.l.b16 %v738
      %v947 = vunpack.c.l.b16 %v739
      %v948 = vunpack.c.l.b16 %v740
      %v949 = vunpack.c.l.b16 %v741
      %v950 = vunpack.c.l.b16 %v742
      %v951 = vunpack.c.l.b16 %v743
      %v952 = vunpack.c.l.b16 %v744
      %v953 = vunpack.c.l.b16 %v745
      %v954 = vunpack.c.l.b16 %v746
      %v955 = vunpack.c.l.b16 %v747
      %v956 = vunpack.c.l.b16 %v748
      %v957 = vunpack.c.l.b16 %v749
      %v958 = vunpack.c.l.b16 %v750
      %v959 = vunpack.c.l.b16 %v751
      %v960 = vunpack.c.l.b16 %v752
      %v961 = vunpack.c.l.b16 %v753
      %v962 = vunpack.c.l.b16 %v754
      %v963 = vunpack.c.l.b16 %v755
      %v964 = vunpack.c.l.b16 %v756
      %v965 = vunpack.c.l.b16 %v757
      %v966 = vunpack.c.l.b16 %v758
      %v967 = vunpack.c.l.b16 %v759
      %v968 = vunpack.c.l.b16 %v760
      %v969 = vunpack.c.l.b16 %v761
      %v970 = vunpack.c.l.b16 %v762
      %v971 = vunpack.c.l.b16 %v763
      %v972 = vunpack.c.l.b16 %v764
      %v973 = vunpack.c.l.b16 %v765
      %v974 = vunpack.c.l.b16 %v766
      %v975 = vunpack.c.l.b16 %v767
      %v976 = vunpack.c.l.b16 %v768
      %v977 = vunpack.c.l.b16 %v769
      %v978 = vunpack.c.l.b16 %v770
      %v979 = vunpack.c.l.b16 %v771
      %v980 = vunpack.c.l.b16 %v772
      %v981 = vunpack.c.l.b16 %v773
      %v982 = vunpack.c.l.b16 %v774
      %v983 = vunpack.c.l.b16 %v775
      %v984 = vunpack.c.l.b16 %v776
      %v985 = vunpack.c.l.b16 %v777
      %v986 = vunpack.c.l.b16 %v778
      %v987 = vunpack.c.l.b16 %v779
      %v988 = vunpack.c.l.b16 %v780
      %v989 = vunpack.c.l.b16 %v781
      %v990 = vunpack.c.l.b16 %v782
      %v991 = vunpack.c.l.b16 %v783
      %v992 = vunpack.c.l.b16 %v784
      %v993 = vunpack.c.l.b16 %v785
      %v994 = vunpack.c.l.b16 %v786
      %v995 = vunpack.c.l.b16 %v787
      %v996 = vunpack.c.l.b16 %v788
      %v997 = vunpack.c.l.b16 %v789
      %v998 = vpack.c.b16 %v935, %v934
      %v999 = vpack.c.b16 %v937, %v936
      %v1000 = vpack.c.b16 %v939, %v938
      %v1001 = vpack.c.b16 %v941, %v940
      %v1002 = vpack.c.b16 %v943, %v942
      %v1003 = vpack.c.b16 %v945, %v944
      %v1004 = vpack.c.b16 %v947, %v946
      %v1005 = vpack.c.b16 %v949, %v948
      %v1006 = vpack.c.b16 %v951, %v950
      %v1007 = vpack.c.b16 %v953, %v952
      %v1008 = vpack.c.b16 %v955, %v954
      %v1009 = vpack.c.b16 %v957, %v956
      %v1010 = vpack.c.b16 %v959, %v958
      %v1011 = vpack.c.b16 %v961, %v960
      %v1012 = vpack.c.b16 %v963, %v962
      %v1013 = vpack.c.b16 %v965, %v964
      %v1014 = vpack.c.b16 %v967, %v966
      %v1015 = vpack.c.b16 %v969, %v968
      %v1016 = vpack.c.b16 %v971, %v970
      %v1017 = vpack.c.b16 %v973, %v972
      %v1018 = vpack.c.b16 %v975, %v974
      %v1019 = vpack.c.b16 %v977, %v976
      %v1020 = vpack.c.b16 %v979, %v978
      %v1021 = vpack.c.b16 %v981, %v980
      %v1022 = vpack.c.b16 %v983, %v982
      %v1023 = vpack.c.b16 %v985, %v984
      %v1024 = vpack.c.b16 %v987, %v986
      %v1025 = vpack.c.b16 %v989, %v988
      %v1026 = vpack.c.b16 %v991, %v990
      %v1027 = vpack.c.b16 %v993, %v992
      %v1028 = vpack.c.b16 %v995, %v994
      %v1029 = vpack.c.b16 %v997, %v996
      %1062 = vmatprep.subr.bf16.mxu0 0
      %1063 = vmatpush1.bf16.msra.mxu0 %v998
      %1064 = vmatprep.subr.bf16.mxu0 0
      %1065 = vmatpush1.bf16.msra.mxu0 %v999
      %1066 = vmatprep.subr.bf16.mxu0 0
      %1067 = vmatpush1.bf16.msra.mxu0 %v1000
      %1068 = vmatprep.subr.bf16.mxu0 0
      %1069 = vmatpush1.bf16.msra.mxu0 %v1001
      %1070 = vmatprep.subr.bf16.mxu0 0
      %1071 = vmatpush1.bf16.msra.mxu0 %v1002
      %1072 = vmatprep.subr.bf16.mxu0 0
      %1073 = vmatpush1.bf16.msra.mxu0 %v1003
      %1074 = vmatprep.subr.bf16.mxu0 0
      %1075 = vmatpush1.bf16.msra.mxu0 %v1004
      %1076 = vmatprep.subr.bf16.mxu0 0
      %1077 = vmatpush1.bf16.msra.mxu0 %v1005
      %1078 = vmatprep.subr.bf16.mxu0 0
      %1079 = vmatpush1.bf16.msra.mxu0 %v1006
      %1080 = vmatprep.subr.bf16.mxu0 0
      %1081 = vmatpush1.bf16.msra.mxu0 %v1007
      %1082 = vmatprep.subr.bf16.mxu0 0
      %1083 = vmatpush1.bf16.msra.mxu0 %v1008
      %1084 = vmatprep.subr.bf16.mxu0 0
      %1085 = vmatpush1.bf16.msra.mxu0 %v1009
      %1086 = vmatprep.subr.bf16.mxu0 0
      %1087 = vmatpush1.bf16.msra.mxu0 %v1010
      %1088 = vmatprep.subr.bf16.mxu0 0
      %1089 = vmatpush1.bf16.msra.mxu0 %v1011
      %1090 = vmatprep.subr.bf16.mxu0 0
      %1091 = vmatpush1.bf16.msra.mxu0 %v1012
      %1092 = vmatprep.subr.bf16.mxu0 0
      %1093 = vmatpush1.bf16.msra.mxu0 %v1013
      %1094 = vmatprep.mubr.bf16.mxu0 %v839
      %1095 = vmatmul.mubr.bf16.gmra.mrb[0].mxu0 %v838
      %v1096 = vpop.f32.mrb[0].mxu0
      %v1097 = vadd.f32 0.0, %v1096
      %v1098 = vpop.f32.mrb[0].mxu0
      %v1099 = vpop.f32.mrb[0].mxu0
      %v1100 = vadd.f32 0.0, %v1099
      %v1101 = vpop.f32.mrb[0].mxu0
      %1102 = vmatprep.mubr.bf16.mxu0 %v843
      %1103 = vmatmul.mubr.bf16.gmra.mrb[0].mxu0 %v842
      %v1104 = vpop.f32.mrb[0].mxu0
      %v1105 = vadd.f32 0.0, %v1104
      %v1106 = vpop.f32.mrb[0].mxu0
      %v1107 = vpop.f32.mrb[0].mxu0
      %v1108 = vadd.f32 0.0, %v1107
      %v1109 = vpop.f32.mrb[0].mxu0
      %1110 = vmatprep.mubr.bf16.mxu0 %v847
      %1111 = vmatmul.mubr.bf16.gmra.mrb[0].mxu0 %v846
      %v1112 = vpop.f32.mrb[0].mxu0
      %v1113 = vadd.f32 0.0, %v1112
      %v1114 = vpop.f32.mrb[0].mxu0
      %v1115 = vpop.f32.mrb[0].mxu0
      %v1116 = vadd.f32 0.0, %v1115
      %v1117 = vpop.f32.mrb[0].mxu0
      %1118 = vmatprep.mubr.bf16.mxu0 %v851
      %1119 = vmatmul.mubr.bf16.gmra.mrb[0].mxu0 %v850
      %v1120 = vpop.f32.mrb[0].mxu0
      %v1121 = vadd.f32 0.0, %v1120
      %v1122 = vpop.f32.mrb[0].mxu0
      %v1123 = vpop.f32.mrb[0].mxu0
      %v1124 = vadd.f32 0.0, %v1123
      %v1125 = vpop.f32.mrb[0].mxu0
      %1126 = vdwg.mxu0
      %1127 = vmatprep.subr.bf16.mxu0 0
      %1128 = vmatpush1.bf16.msra.mxu0 %v1014
      %1129 = vmatprep.subr.bf16.mxu0 0
      %1130 = vmatpush1.bf16.msra.mxu0 %v1015
      %1131 = vmatprep.subr.bf16.mxu0 0
      %1132 = vmatpush1.bf16.msra.mxu0 %v1016
      %1133 = vmatprep.subr.bf16.mxu0 0
      %1134 = vmatpush1.bf16.msra.mxu0 %v1017
      %1135 = vmatprep.subr.bf16.mxu0 0
      %1136 = vmatpush1.bf16.msra.mxu0 %v1018
      %1137 = vmatprep.subr.bf16.mxu0 0
      %1138 = vmatpush1.bf16.msra.mxu0 %v1019
      %1139 = vmatprep.subr.bf16.mxu0 0
      %1140 = vmatpush1.bf16.msra.mxu0 %v1020
      %1141 = vmatprep.subr.bf16.mxu0 0
      %1142 = vmatpush1.bf16.msra.mxu0 %v1021
      %1143 = vmatprep.subr.bf16.mxu0 0
      %1144 = vmatpush1.bf16.msra.mxu0 %v1022
      %1145 = vmatprep.subr.bf16.mxu0 0
      %1146 = vmatpush1.bf16.msra.mxu0 %v1023
      %1147 = vmatprep.subr.bf16.mxu0 0
      %1148 = vmatpush1.bf16.msra.mxu0 %v1024
      %1149 = vmatprep.subr.bf16.mxu0 0
      %1150 = vmatpush1.bf16.msra.mxu0 %v1025
      %1151 = vmatprep.subr.bf16.mxu0 0
      %1152 = vmatpush1.bf16.msra.mxu0 %v1026
      %1153 = vmatprep.subr.bf16.mxu0 0
      %1154 = vmatpush1.bf16.msra.mxu0 %v1027
      %1155 = vmatprep.subr.bf16.mxu0 0
      %1156 = vmatpush1.bf16.msra.mxu0 %v1028
      %1157 = vmatprep.subr.bf16.mxu0 0
      %1158 = vmatpush1.bf16.msra.mxu0 %v1029
      %1159 = vmatprep.mubr.bf16.mxu0 %v841
      %1160 = vmatmul.mubr.bf16.gmra.mrb[0].mxu0 %v840
      %v1161 = vpop.f32.mrb[0].mxu0
      %v1162 = vadd.f32 %v1097, %v1161
      %v1163 = vpop.f32.mrb[0].mxu0
      %v1164 = vpop.f32.mrb[0].mxu0
      %v1165 = vadd.f32 %v1100, %v1164
      %v1166 = vpop.f32.mrb[0].mxu0
      %1167 = vmatprep.mubr.bf16.mxu0 %v845
      %1168 = vmatmul.mubr.bf16.gmra.mrb[0].mxu0 %v844
      %v1169 = vpop.f32.mrb[0].mxu0
      %v1170 = vadd.f32 %v1105, %v1169
      %v1171 = vpop.f32.mrb[0].mxu0
      %v1172 = vpop.f32.mrb[0].mxu0
      %v1173 = vadd.f32 %v1108, %v1172
      %v1174 = vpop.f32.mrb[0].mxu0
      %1175 = vmatprep.mubr.bf16.mxu0 %v849
      %1176 = vmatmul.mubr.bf16.gmra.mrb[0].mxu0 %v848
      %v1177 = vpop.f32.mrb[0].mxu0
      %v1178 = vadd.f32 %v1113, %v1177
      %v1179 = vpop.f32.mrb[0].mxu0
      %v1180 = vpop.f32.mrb[0].mxu0
      %v1181 = vadd.f32 %v1116, %v1180
      %v1182 = vpop.f32.mrb[0].mxu0
      %1183 = vmatprep.mubr.bf16.mxu0 %v853
      %1184 = vmatmul.mubr.bf16.gmra.mrb[0].mxu0 %v852
      %v1185 = vpop.f32.mrb[0].mxu0
      %v1186 = vadd.f32 %v1121, %v1185
      %v1187 = vpop.f32.mrb[0].mxu0
      %v1188 = vpop.f32.mrb[0].mxu0
      %v1189 = vadd.f32 %v1124, %v1188
      %v1190 = vpop.f32.mrb[0].mxu0
      %1191 = vdwg.mxu0
      %v1192 = vlaneseq
      %v1193 = vshrl.u32 %v1192, 7
      %v1194 = vadd.s32 %v1193, 8
      %v1195 = vlaneseq
      %v1196 = vand.u32 %v1195, 127
      %v1197 = vand.u32 %v1196, 15
      %vm1198 = vcmp.eq.s32.totalorder %v1193, %v1197
      %vm1199 = vcmp.eq.s32.totalorder %v1194, %v1197
      %v1200 = vsel %vm1198, 1, 0
      %v1201 = vsel %vm1199, 1, 0
      %v1202 = vcvt.s32.f32 %v1200
      %v1203 = vcvt.s32.f32 %v1201
      %v1204 = vpack.c.bf16 %v1203, %v1202
      %v1205 = vld [vmem:[%s419] sm:$0xff]
      %v1206 = vld [vmem:[%s419 + $0x8] sm:$0xff]
      %v1207 = vld [vmem:[%s419 + $0x10] sm:$0xff]
      %v1208 = vld [vmem:[%s419 + $0x18] sm:$0xff]
      %v1209 = vld [vmem:[%s419 + $0x20] sm:$0xff]
      %v1210 = vld [vmem:[%s419 + $0x28] sm:$0xff]
      %v1211 = vld [vmem:[%s419 + $0x30] sm:$0xff]
      %v1212 = vld [vmem:[%s419 + $0x38] sm:$0xff]
      %v1213 = vpack.c.bf16 %v1165, %v1162
      %v1214 = vpack.c.bf16 %v1173, %v1170
      %v1215 = vpack.c.bf16 %v1181, %v1178
      %v1216 = vpack.c.bf16 %v1189, %v1186
      %vm1217 = vcmask 130048
      %v1219 = vsel %vm1217, %v1213, 0
      %v1222 = vsel %vm1217, %v1214, 0
      %v1225 = vsel %vm1217, %v1215, 0
      %v1228 = vsel %vm1217, %v1216, 0
      %1230 = vmatprep.subr.bf16.mxu0 0
      %1231 = vmatpush1.bf16.msra.mxu0 %v1204
      %1232 = vmatprep.subr.bf16.mxu0 0
      %1233 = vmatpush1.bf16.msra.mxu0 0
      %1234 = vmatprep.subr.bf16.mxu0 0
      %1235 = vmatpush1.bf16.msra.mxu0 0
      %1236 = vmatprep.subr.bf16.mxu0 0
      %1237 = vmatpush1.bf16.msra.mxu0 0
      %1238 = vmatprep.subr.bf16.mxu0 0
      %1239 = vmatpush1.bf16.msra.mxu0 0
      %1240 = vmatprep.subr.bf16.mxu0 0
      %1241 = vmatpush1.bf16.msra.mxu0 0
      %1242 = vmatprep.subr.bf16.mxu0 0
      %1243 = vmatpush1.bf16.msra.mxu0 0
      %1244 = vmatprep.subr.bf16.mxu0 0
      %1245 = vmatpush1.bf16.msra.mxu0 0
      %1246 = vmatprep.subr.bf16.mxu0 0
      %1247 = vmatpush1.bf16.msra.mxu0 0
      %1248 = vmatprep.subr.bf16.mxu0 0
      %1249 = vmatpush1.bf16.msra.mxu0 0
      %1250 = vmatprep.subr.bf16.mxu0 0
      %1251 = vmatpush1.bf16.msra.mxu0 0
      %1252 = vmatprep.subr.bf16.mxu0 0
      %1253 = vmatpush1.bf16.msra.mxu0 0
      %1254 = vmatprep.subr.bf16.mxu0 0
      %1255 = vmatpush1.bf16.msra.mxu0 0
      %1256 = vmatprep.subr.bf16.mxu0 0
      %1257 = vmatpush1.bf16.msra.mxu0 0
      %1258 = vmatprep.subr.bf16.mxu0 0
      %1259 = vmatpush1.bf16.msra.mxu0 0
      %1260 = vmatprep.subr.bf16.mxu0 0
      %1261 = vmatpush1.bf16.msra.mxu0 0
      %1262 = vmatprep.mubr.bf16.mxu0 0
      %1263 = vmatmul.mubr.bf16.gmra.mrb[0].mxu0 %v1219
      %v1264 = vpop.f32.mrb[0].mxu0
      %v1265 = vadd.f32 0.0, %v1264
      %v1266 = vpop.f32.mrb[0].mxu0
      %v1267 = vpop.f32.mrb[0].mxu0
      %v1268 = vadd.f32 0.0, %v1267
      %v1269 = vpop.f32.mrb[0].mxu0
      %1270 = vmatprep.mubr.bf16.mxu0 0
      %1271 = vmatmul.mubr.bf16.gmra.mrb[0].mxu0 %v1222
      %v1272 = vpop.f32.mrb[0].mxu0
      %v1273 = vadd.f32 0.0, %v1272
      %v1274 = vpop.f32.mrb[0].mxu0
      %v1275 = vpop.f32.mrb[0].mxu0
      %v1276 = vadd.f32 0.0, %v1275
      %v1277 = vpop.f32.mrb[0].mxu0
      %1278 = vmatprep.mubr.bf16.mxu0 0
      %1279 = vmatmul.mubr.bf16.gmra.mrb[0].mxu0 %v1225
      %v1280 = vpop.f32.mrb[0].mxu0
      %v1281 = vadd.f32 0.0, %v1280
      %v1282 = vpop.f32.mrb[0].mxu0
      %v1283 = vpop.f32.mrb[0].mxu0
      %v1284 = vadd.f32 0.0, %v1283
      %v1285 = vpop.f32.mrb[0].mxu0
      %1286 = vmatprep.mubr.bf16.mxu0 0
      %1287 = vmatmul.mubr.bf16.gmra.mrb[0].mxu0 %v1228
      %v1288 = vpop.f32.mrb[0].mxu0
      %v1289 = vadd.f32 0.0, %v1288
      %v1290 = vpop.f32.mrb[0].mxu0
      %v1291 = vpop.f32.mrb[0].mxu0
      %v1292 = vadd.f32 0.0, %v1291
      %v1293 = vpop.f32.mrb[0].mxu0
      %1294 = vdwg.mxu0
      %1296 = vset.pattern.permute.xlu0 0
      %1297 = vperm.xlu0 %1296, %v636
      %v1298 = vpop.permute.xlu0 %1297
      %1301 = vset.pattern.permute.xlu0 0
      %1302 = vperm.xlu0 %1301, %v639
      %v1303 = vpop.permute.xlu0 %1302
      %1306 = vset.pattern.permute.xlu0 0
      %1307 = vperm.xlu0 %1306, %v644
      %v1308 = vpop.permute.xlu0 %1307
      %1311 = vset.pattern.permute.xlu0 0
      %1312 = vperm.xlu0 %1311, %v647
      %v1313 = vpop.permute.xlu0 %1312
      %1316 = vset.pattern.permute.xlu0 0
      %1317 = vperm.xlu0 %1316, %v652
      %v1318 = vpop.permute.xlu0 %1317
      %1321 = vset.pattern.permute.xlu0 0
      %1322 = vperm.xlu0 %1321, %v655
      %v1323 = vpop.permute.xlu0 %1322
      %1326 = vset.pattern.permute.xlu0 0
      %1327 = vperm.xlu0 %1326, %v660
      %v1328 = vpop.permute.xlu0 %1327
      %1331 = vset.pattern.permute.xlu0 0
      %1332 = vperm.xlu0 %1331, %v663
      %v1333 = vpop.permute.xlu0 %1332
      %v1335 = vlaneseq
      %v1336 = vshrl.u32 %v1335, 7
      %v1337 = vsub.s32 0, %v1336
      %v1338 = vrot.slane %v705, %v1337
      %v1339 = vadd.f32 %v1298, %v1338
      %v1340 = vadd.f32 %v1303, %v1338
      %v1341 = vadd.f32 %v1308, %v1338
      %v1342 = vadd.f32 %v1313, %v1338
      %v1343 = vadd.f32 %v1318, %v1338
      %v1344 = vadd.f32 %v1323, %v1338
      %v1345 = vadd.f32 %v1328, %v1338
      %v1346 = vadd.f32 %v1333, %v1338
      %v1347 = vadd.f32 %v1339, %v1265
      %v1348 = vadd.f32 %v1340, %v1268
      %v1349 = vadd.f32 %v1341, %v1273
      %v1350 = vadd.f32 %v1342, %v1276
      %v1351 = vadd.f32 %v1343, %v1281
      %v1352 = vadd.f32 %v1344, %v1284
      %v1353 = vadd.f32 %v1345, %v1289
      %v1354 = vadd.f32 %v1346, %v1292
      %1359 = vrot.lane.b32.xlu0 %v1213, 112
      %v1360 = vpop.permute.xlu0 %1359
      %1361 = vrot.lane.b32.xlu0 %v1214, 112
      %v1362 = vpop.permute.xlu0 %1361
      %1363 = vrot.lane.b32.xlu0 %v1215, 112
      %v1364 = vpop.permute.xlu0 %1363
      %1365 = vrot.lane.b32.xlu0 %v1216, 112
      %v1366 = vpop.permute.xlu0 %1365
      %v1368 = vsel %vm1217, %v1360, 0
      %v1371 = vsel %vm1217, %v1362, 0
      %v1374 = vsel %vm1217, %v1364, 0
      %v1377 = vsel %vm1217, %v1366, 0
      %1379 = vmatprep.subr.bf16.mxu0 0
      %1380 = vmatpush1.bf16.msra.mxu0 %v1204
      %1381 = vmatprep.subr.bf16.mxu0 0
      %1382 = vmatpush1.bf16.msra.mxu0 0
      %1383 = vmatprep.subr.bf16.mxu0 0
      %1384 = vmatpush1.bf16.msra.mxu0 0
      %1385 = vmatprep.subr.bf16.mxu0 0
      %1386 = vmatpush1.bf16.msra.mxu0 0
      %1387 = vmatprep.subr.bf16.mxu0 0
      %1388 = vmatpush1.bf16.msra.mxu0 0
      %1389 = vmatprep.subr.bf16.mxu0 0
      %1390 = vmatpush1.bf16.msra.mxu0 0
      %1391 = vmatprep.subr.bf16.mxu0 0
      %1392 = vmatpush1.bf16.msra.mxu0 0
      %1393 = vmatprep.subr.bf16.mxu0 0
      %1394 = vmatpush1.bf16.msra.mxu0 0
      %1395 = vmatprep.subr.bf16.mxu0 0
      %1396 = vmatpush1.bf16.msra.mxu0 0
      %1397 = vmatprep.subr.bf16.mxu0 0
      %1398 = vmatpush1.bf16.msra.mxu0 0
      %1399 = vmatprep.subr.bf16.mxu0 0
      %1400 = vmatpush1.bf16.msra.mxu0 0
      %1401 = vmatprep.subr.bf16.mxu0 0
      %1402 = vmatpush1.bf16.msra.mxu0 0
      %1403 = vmatprep.subr.bf16.mxu0 0
      %1404 = vmatpush1.bf16.msra.mxu0 0
      %1405 = vmatprep.subr.bf16.mxu0 0
      %1406 = vmatpush1.bf16.msra.mxu0 0
      %1407 = vmatprep.subr.bf16.mxu0 0
      %1408 = vmatpush1.bf16.msra.mxu0 0
      %1409 = vmatprep.subr.bf16.mxu0 0
      %1410 = vmatpush1.bf16.msra.mxu0 0
      %1411 = vmatprep.mubr.bf16.mxu0 0
      %1412 = vmatmul.mubr.bf16.gmra.mrb[0].mxu0 %v1368
      %v1413 = vpop.f32.mrb[0].mxu0
      %v1414 = vadd.f32 0.0, %v1413
      %v1415 = vpop.f32.mrb[0].mxu0
      %v1416 = vpop.f32.mrb[0].mxu0
      %v1417 = vadd.f32 0.0, %v1416
      %v1418 = vpop.f32.mrb[0].mxu0
      %1419 = vmatprep.mubr.bf16.mxu0 0
      %1420 = vmatmul.mubr.bf16.gmra.mrb[0].mxu0 %v1371
      %v1421 = vpop.f32.mrb[0].mxu0
      %v1422 = vadd.f32 0.0, %v1421
      %v1423 = vpop.f32.mrb[0].mxu0
      %v1424 = vpop.f32.mrb[0].mxu0
      %v1425 = vadd.f32 0.0, %v1424
      %v1426 = vpop.f32.mrb[0].mxu0
      %1427 = vmatprep.mubr.bf16.mxu0 0
      %1428 = vmatmul.mubr.bf16.gmra.mrb[0].mxu0 %v1374
      %v1429 = vpop.f32.mrb[0].mxu0
      %v1430 = vadd.f32 0.0, %v1429
      %v1431 = vpop.f32.mrb[0].mxu0
      %v1432 = vpop.f32.mrb[0].mxu0
      %v1433 = vadd.f32 0.0, %v1432
      %v1434 = vpop.f32.mrb[0].mxu0
      %1435 = vmatprep.mubr.bf16.mxu0 0
      %1436 = vmatmul.mubr.bf16.gmra.mrb[0].mxu0 %v1377
      %v1437 = vpop.f32.mrb[0].mxu0
      %v1438 = vadd.f32 0.0, %v1437
      %v1439 = vpop.f32.mrb[0].mxu0
      %v1440 = vpop.f32.mrb[0].mxu0
      %v1441 = vadd.f32 0.0, %v1440
      %v1442 = vpop.f32.mrb[0].mxu0
      %1443 = vdwg.mxu0
      %1444 = vset.pattern.permute.xlu0 1
      %1445 = vperm.xlu0 %1444, %v636
      %v1446 = vpop.permute.xlu0 %1445
      %1448 = vset.pattern.permute.xlu0 1
      %1449 = vperm.xlu0 %1448, %v639
      %v1450 = vpop.permute.xlu0 %1449
      %1452 = vset.pattern.permute.xlu0 1
      %1453 = vperm.xlu0 %1452, %v644
      %v1454 = vpop.permute.xlu0 %1453
      %1456 = vset.pattern.permute.xlu0 1
      %1457 = vperm.xlu0 %1456, %v647
      %v1458 = vpop.permute.xlu0 %1457
      %1460 = vset.pattern.permute.xlu0 1
      %1461 = vperm.xlu0 %1460, %v652
      %v1462 = vpop.permute.xlu0 %1461
      %1464 = vset.pattern.permute.xlu0 1
      %1465 = vperm.xlu0 %1464, %v655
      %v1466 = vpop.permute.xlu0 %1465
      %1468 = vset.pattern.permute.xlu0 1
      %1469 = vperm.xlu0 %1468, %v660
      %v1470 = vpop.permute.xlu0 %1469
      %1472 = vset.pattern.permute.xlu0 1
      %1473 = vperm.xlu0 %1472, %v663
      %v1474 = vpop.permute.xlu0 %1473
      %v1476 = vlaneseq
      %v1477 = vshrl.u32 %v1476, 7
      %v1478 = vsub.s32 1, %v1477
      %v1479 = vrot.slane %v705, %v1478
      %v1480 = vadd.f32 %v1446, %v1479
      %v1481 = vadd.f32 %v1450, %v1479
      %v1482 = vadd.f32 %v1454, %v1479
      %v1483 = vadd.f32 %v1458, %v1479
      %v1484 = vadd.f32 %v1462, %v1479
      %v1485 = vadd.f32 %v1466, %v1479
      %v1486 = vadd.f32 %v1470, %v1479
      %v1487 = vadd.f32 %v1474, %v1479
      %v1488 = vadd.f32 %v1480, %v1414
      %v1489 = vadd.f32 %v1481, %v1417
      %v1490 = vadd.f32 %v1482, %v1422
      %v1491 = vadd.f32 %v1483, %v1425
      %v1492 = vadd.f32 %v1484, %v1430
      %v1493 = vadd.f32 %v1485, %v1433
      %v1494 = vadd.f32 %v1486, %v1438
      %v1495 = vadd.f32 %v1487, %v1441
      %1496 = vrot.lane.b32.xlu0 %v1213, 96
      %v1497 = vpop.permute.xlu0 %1496
      %1498 = vrot.lane.b32.xlu0 %v1214, 96
      %v1499 = vpop.permute.xlu0 %1498
      %1500 = vrot.lane.b32.xlu0 %v1215, 96
      %v1501 = vpop.permute.xlu0 %1500
      %1502 = vrot.lane.b32.xlu0 %v1216, 96
      %v1503 = vpop.permute.xlu0 %1502
      %v1505 = vsel %vm1217, %v1497, 0
      %v1508 = vsel %vm1217, %v1499, 0
      %v1511 = vsel %vm1217, %v1501, 0
      %v1514 = vsel %vm1217, %v1503, 0
      %1516 = vmatprep.subr.bf16.mxu0 0
      %1517 = vmatpush1.bf16.msra.mxu0 %v1204
      %1518 = vmatprep.subr.bf16.mxu0 0
      %1519 = vmatpush1.bf16.msra.mxu0 0
      %1520 = vmatprep.subr.bf16.mxu0 0
      %1521 = vmatpush1.bf16.msra.mxu0 0
      %1522 = vmatprep.subr.bf16.mxu0 0
      %1523 = vmatpush1.bf16.msra.mxu0 0
      %1524 = vmatprep.subr.bf16.mxu0 0
      %1525 = vmatpush1.bf16.msra.mxu0 0
      %1526 = vmatprep.subr.bf16.mxu0 0
      %1527 = vmatpush1.bf16.msra.mxu0 0
      %1528 = vmatprep.subr.bf16.mxu0 0
      %1529 = vmatpush1.bf16.msra.mxu0 0
      %1530 = vmatprep.subr.bf16.mxu0 0
      %1531 = vmatpush1.bf16.msra.mxu0 0
      %1532 = vmatprep.subr.bf16.mxu0 0
      %1533 = vmatpush1.bf16.msra.mxu0 0
      %1534 = vmatprep.subr.bf16.mxu0 0
      %1535 = vmatpush1.bf16.msra.mxu0 0
      %1536 = vmatprep.subr.bf16.mxu0 0
      %1537 = vmatpush1.bf16.msra.mxu0 0
      %1538 = vmatprep.subr.bf16.mxu0 0
      %1539 = vmatpush1.bf16.msra.mxu0 0
      %1540 = vmatprep.subr.bf16.mxu0 0
      %1541 = vmatpush1.bf16.msra.mxu0 0
      %1542 = vmatprep.subr.bf16.mxu0 0
      %1543 = vmatpush1.bf16.msra.mxu0 0
      %1544 = vmatprep.subr.bf16.mxu0 0
      %1545 = vmatpush1.bf16.msra.mxu0 0
      %1546 = vmatprep.subr.bf16.mxu0 0
      %1547 = vmatpush1.bf16.msra.mxu0 0
      %1548 = vmatprep.mubr.bf16.mxu0 0
      %1549 = vmatmul.mubr.bf16.gmra.mrb[0].mxu0 %v1505
      %v1550 = vpop.f32.mrb[0].mxu0
      %v1551 = vadd.f32 0.0, %v1550
      %v1552 = vpop.f32.mrb[0].mxu0
      %v1553 = vpop.f32.mrb[0].mxu0
      %v1554 = vadd.f32 0.0, %v1553
      %v1555 = vpop.f32.mrb[0].mxu0
      %1556 = vmatprep.mubr.bf16.mxu0 0
      %1557 = vmatmul.mubr.bf16.gmra.mrb[0].mxu0 %v1508
      %v1558 = vpop.f32.mrb[0].mxu0
      %v1559 = vadd.f32 0.0, %v1558
      %v1560 = vpop.f32.mrb[0].mxu0
      %v1561 = vpop.f32.mrb[0].mxu0
      %v1562 = vadd.f32 0.0, %v1561
      %v1563 = vpop.f32.mrb[0].mxu0
      %1564 = vmatprep.mubr.bf16.mxu0 0
      %1565 = vmatmul.mubr.bf16.gmra.mrb[0].mxu0 %v1511
      %v1566 = vpop.f32.mrb[0].mxu0
      %v1567 = vadd.f32 0.0, %v1566
      %v1568 = vpop.f32.mrb[0].mxu0
      %v1569 = vpop.f32.mrb[0].mxu0
      %v1570 = vadd.f32 0.0, %v1569
      %v1571 = vpop.f32.mrb[0].mxu0
      %1572 = vmatprep.mubr.bf16.mxu0 0
      %1573 = vmatmul.mubr.bf16.gmra.mrb[0].mxu0 %v1514
      %v1574 = vpop.f32.mrb[0].mxu0
      %v1575 = vadd.f32 0.0, %v1574
      %v1576 = vpop.f32.mrb[0].mxu0
      %v1577 = vpop.f32.mrb[0].mxu0
      %v1578 = vadd.f32 0.0, %v1577
      %v1579 = vpop.f32.mrb[0].mxu0
      %1580 = vdwg.mxu0
      %1581 = vset.pattern.permute.xlu0 2
      %1582 = vperm.xlu0 %1581, %v636
      %v1583 = vpop.permute.xlu0 %1582
      %1585 = vset.pattern.permute.xlu0 2
      %1586 = vperm.xlu0 %1585, %v639
      %v1587 = vpop.permute.xlu0 %1586
      %1589 = vset.pattern.permute.xlu0 2
      %1590 = vperm.xlu0 %1589, %v644
      %v1591 = vpop.permute.xlu0 %1590
      %1593 = vset.pattern.permute.xlu0 2
      %1594 = vperm.xlu0 %1593, %v647
      %v1595 = vpop.permute.xlu0 %1594
      %1597 = vset.pattern.permute.xlu0 2
      %1598 = vperm.xlu0 %1597, %v652
      %v1599 = vpop.permute.xlu0 %1598
      %1601 = vset.pattern.permute.xlu0 2
      %1602 = vperm.xlu0 %1601, %v655
      %v1603 = vpop.permute.xlu0 %1602
      %1605 = vset.pattern.permute.xlu0 2
      %1606 = vperm.xlu0 %1605, %v660
      %v1607 = vpop.permute.xlu0 %1606
      %1609 = vset.pattern.permute.xlu0 2
      %1610 = vperm.xlu0 %1609, %v663
      %v1611 = vpop.permute.xlu0 %1610
      %v1613 = vlaneseq
      %v1614 = vshrl.u32 %v1613, 7
      %v1615 = vsub.s32 2, %v1614
      %v1616 = vrot.slane %v705, %v1615
      %v1617 = vadd.f32 %v1583, %v1616
      %v1618 = vadd.f32 %v1587, %v1616
      %v1619 = vadd.f32 %v1591, %v1616
      %v1620 = vadd.f32 %v1595, %v1616
      %v1621 = vadd.f32 %v1599, %v1616
      %v1622 = vadd.f32 %v1603, %v1616
      %v1623 = vadd.f32 %v1607, %v1616
      %v1624 = vadd.f32 %v1611, %v1616
      %v1625 = vadd.f32 %v1617, %v1551
      %v1626 = vadd.f32 %v1618, %v1554
      %v1627 = vadd.f32 %v1619, %v1559
      %v1628 = vadd.f32 %v1620, %v1562
      %v1629 = vadd.f32 %v1621, %v1567
      %v1630 = vadd.f32 %v1622, %v1570
      %v1631 = vadd.f32 %v1623, %v1575
      %v1632 = vadd.f32 %v1624, %v1578
      %1633 = vrot.lane.b32.xlu0 %v1213, 80
      %v1634 = vpop.permute.xlu0 %1633
      %1635 = vrot.lane.b32.xlu0 %v1214, 80
      %v1636 = vpop.permute.xlu0 %1635
      %1637 = vrot.lane.b32.xlu0 %v1215, 80
      %v1638 = vpop.permute.xlu0 %1637
      %1639 = vrot.lane.b32.xlu0 %v1216, 80
      %v1640 = vpop.permute.xlu0 %1639
      %v1642 = vsel %vm1217, %v1634, 0
      %v1645 = vsel %vm1217, %v1636, 0
      %v1648 = vsel %vm1217, %v1638, 0
      %v1651 = vsel %vm1217, %v1640, 0
      %1653 = vmatprep.subr.bf16.mxu0 0
      %1654 = vmatpush1.bf16.msra.mxu0 %v1204
      %1655 = vmatprep.subr.bf16.mxu0 0
      %1656 = vmatpush1.bf16.msra.mxu0 0
      %1657 = vmatprep.subr.bf16.mxu0 0
      %1658 = vmatpush1.bf16.msra.mxu0 0
      %1659 = vmatprep.subr.bf16.mxu0 0
      %1660 = vmatpush1.bf16.msra.mxu0 0
      %1661 = vmatprep.subr.bf16.mxu0 0
      %1662 = vmatpush1.bf16.msra.mxu0 0
      %1663 = vmatprep.subr.bf16.mxu0 0
      %1664 = vmatpush1.bf16.msra.mxu0 0
      %1665 = vmatprep.subr.bf16.mxu0 0
      %1666 = vmatpush1.bf16.msra.mxu0 0
      %1667 = vmatprep.subr.bf16.mxu0 0
      %1668 = vmatpush1.bf16.msra.mxu0 0
      %1669 = vmatprep.subr.bf16.mxu0 0
      %1670 = vmatpush1.bf16.msra.mxu0 0
      %1671 = vmatprep.subr.bf16.mxu0 0
      %1672 = vmatpush1.bf16.msra.mxu0 0
      %1673 = vmatprep.subr.bf16.mxu0 0
      %1674 = vmatpush1.bf16.msra.mxu0 0
      %1675 = vmatprep.subr.bf16.mxu0 0
      %1676 = vmatpush1.bf16.msra.mxu0 0
      %1677 = vmatprep.subr.bf16.mxu0 0
      %1678 = vmatpush1.bf16.msra.mxu0 0
      %1679 = vmatprep.subr.bf16.mxu0 0
      %1680 = vmatpush1.bf16.msra.mxu0 0
      %1681 = vmatprep.subr.bf16.mxu0 0
      %1682 = vmatpush1.bf16.msra.mxu0 0
      %1683 = vmatprep.subr.bf16.mxu0 0
      %1684 = vmatpush1.bf16.msra.mxu0 0
      %1685 = vmatprep.mubr.bf16.mxu0 0
      %1686 = vmatmul.mubr.bf16.gmra.mrb[0].mxu0 %v1642
      %v1687 = vpop.f32.mrb[0].mxu0
      %v1688 = vadd.f32 0.0, %v1687
      %v1689 = vpop.f32.mrb[0].mxu0
      %v1690 = vpop.f32.mrb[0].mxu0
      %v1691 = vadd.f32 0.0, %v1690
      %v1692 = vpop.f32.mrb[0].mxu0
      %1693 = vmatprep.mubr.bf16.mxu0 0
      %1694 = vmatmul.mubr.bf16.gmra.mrb[0].mxu0 %v1645
      %v1695 = vpop.f32.mrb[0].mxu0
      %v1696 = vadd.f32 0.0, %v1695
      %v1697 = vpop.f32.mrb[0].mxu0
      %v1698 = vpop.f32.mrb[0].mxu0
      %v1699 = vadd.f32 0.0, %v1698
      %v1700 = vpop.f32.mrb[0].mxu0
      %1701 = vmatprep.mubr.bf16.mxu0 0
      %1702 = vmatmul.mubr.bf16.gmra.mrb[0].mxu0 %v1648
      %v1703 = vpop.f32.mrb[0].mxu0
      %v1704 = vadd.f32 0.0, %v1703
      %v1705 = vpop.f32.mrb[0].mxu0
      %v1706 = vpop.f32.mrb[0].mxu0
      %v1707 = vadd.f32 0.0, %v1706
      %v1708 = vpop.f32.mrb[0].mxu0
      %1709 = vmatprep.mubr.bf16.mxu0 0
      %1710 = vmatmul.mubr.bf16.gmra.mrb[0].mxu0 %v1651
      %v1711 = vpop.f32.mrb[0].mxu0
      %v1712 = vadd.f32 0.0, %v1711
      %v1713 = vpop.f32.mrb[0].mxu0
      %v1714 = vpop.f32.mrb[0].mxu0
      %v1715 = vadd.f32 0.0, %v1714
      %v1716 = vpop.f32.mrb[0].mxu0
      %1717 = vdwg.mxu0
      %1718 = vset.pattern.permute.xlu0 3
      %1719 = vperm.xlu0 %1718, %v636
      %v1720 = vpop.permute.xlu0 %1719
      %1722 = vset.pattern.permute.xlu0 3
      %1723 = vperm.xlu0 %1722, %v639
      %v1724 = vpop.permute.xlu0 %1723
      %1726 = vset.pattern.permute.xlu0 3
      %1727 = vperm.xlu0 %1726, %v644
      %v1728 = vpop.permute.xlu0 %1727
      %1730 = vset.pattern.permute.xlu0 3
      %1731 = vperm.xlu0 %1730, %v647
      %v1732 = vpop.permute.xlu0 %1731
      %1734 = vset.pattern.permute.xlu0 3
      %1735 = vperm.xlu0 %1734, %v652
      %v1736 = vpop.permute.xlu0 %1735
      %1738 = vset.pattern.permute.xlu0 3
      %1739 = vperm.xlu0 %1738, %v655
      %v1740 = vpop.permute.xlu0 %1739
      %1742 = vset.pattern.permute.xlu0 3
      %1743 = vperm.xlu0 %1742, %v660
      %v1744 = vpop.permute.xlu0 %1743
      %1746 = vset.pattern.permute.xlu0 3
      %1747 = vperm.xlu0 %1746, %v663
      %v1748 = vpop.permute.xlu0 %1747
      %v1750 = vlaneseq
      %v1751 = vshrl.u32 %v1750, 7
      %v1752 = vsub.s32 3, %v1751
      %v1753 = vrot.slane %v705, %v1752
      %v1754 = vadd.f32 %v1720, %v1753
      %v1755 = vadd.f32 %v1724, %v1753
      %v1756 = vadd.f32 %v1728, %v1753
      %v1757 = vadd.f32 %v1732, %v1753
      %v1758 = vadd.f32 %v1736, %v1753
      %v1759 = vadd.f32 %v1740, %v1753
      %v1760 = vadd.f32 %v1744, %v1753
      %v1761 = vadd.f32 %v1748, %v1753
      %v1762 = vadd.f32 %v1754, %v1688
      %v1763 = vadd.f32 %v1755, %v1691
      %v1764 = vadd.f32 %v1756, %v1696
      %v1765 = vadd.f32 %v1757, %v1699
      %v1766 = vadd.f32 %v1758, %v1704
      %v1767 = vadd.f32 %v1759, %v1707
      %v1768 = vadd.f32 %v1760, %v1712
      %v1769 = vadd.f32 %v1761, %v1715
      %vm1770 = vcmp.gt.f32.partialorder %v1347, 0.0
      %vm1771 = vcmp.gt.f32.partialorder %v1348, 0.0
      %vm1772 = vcmp.gt.f32.partialorder %v1349, 0.0
      %vm1773 = vcmp.gt.f32.partialorder %v1350, 0.0
      %vm1774 = vcmp.gt.f32.partialorder %v1351, 0.0
      %vm1775 = vcmp.gt.f32.partialorder %v1352, 0.0
      %vm1776 = vcmp.gt.f32.partialorder %v1353, 0.0
      %vm1777 = vcmp.gt.f32.partialorder %v1354, 0.0
      %vm1778 = vcmp.gt.f32.partialorder %v1488, 0.0
      %vm1779 = vcmp.gt.f32.partialorder %v1489, 0.0
      %vm1780 = vcmp.gt.f32.partialorder %v1490, 0.0
      %vm1781 = vcmp.gt.f32.partialorder %v1491, 0.0
      %vm1782 = vcmp.gt.f32.partialorder %v1492, 0.0
      %vm1783 = vcmp.gt.f32.partialorder %v1493, 0.0
      %vm1784 = vcmp.gt.f32.partialorder %v1494, 0.0
      %vm1785 = vcmp.gt.f32.partialorder %v1495, 0.0
      %vm1786 = vcmp.gt.f32.partialorder %v1625, 0.0
      %vm1787 = vcmp.gt.f32.partialorder %v1626, 0.0
      %vm1788 = vcmp.gt.f32.partialorder %v1627, 0.0
      %vm1789 = vcmp.gt.f32.partialorder %v1628, 0.0
      %vm1790 = vcmp.gt.f32.partialorder %v1629, 0.0
      %vm1791 = vcmp.gt.f32.partialorder %v1630, 0.0
      %vm1792 = vcmp.gt.f32.partialorder %v1631, 0.0
      %vm1793 = vcmp.gt.f32.partialorder %v1632, 0.0
      %vm1794 = vcmp.gt.f32.partialorder %v1762, 0.0
      %vm1795 = vcmp.gt.f32.partialorder %v1763, 0.0
      %vm1796 = vcmp.gt.f32.partialorder %v1764, 0.0
      %vm1797 = vcmp.gt.f32.partialorder %v1765, 0.0
      %vm1798 = vcmp.gt.f32.partialorder %v1766, 0.0
      %vm1799 = vcmp.gt.f32.partialorder %v1767, 0.0
      %vm1800 = vcmp.gt.f32.partialorder %v1768, 0.0
      %vm1801 = vcmp.gt.f32.partialorder %v1769, 0.0
      %v1802 = vmul.f32 %v1347, 0.2
      %v1803 = vmul.f32 %v1348, 0.2
      %v1804 = vmul.f32 %v1349, 0.2
      %v1805 = vmul.f32 %v1350, 0.2
      %v1806 = vmul.f32 %v1351, 0.2
      %v1807 = vmul.f32 %v1352, 0.2
      %v1808 = vmul.f32 %v1353, 0.2
      %v1809 = vmul.f32 %v1354, 0.2
      %v1810 = vmul.f32 %v1488, 0.2
      %v1811 = vmul.f32 %v1489, 0.2
      %v1812 = vmul.f32 %v1490, 0.2
      %v1813 = vmul.f32 %v1491, 0.2
      %v1814 = vmul.f32 %v1492, 0.2
      %v1815 = vmul.f32 %v1493, 0.2
      %v1816 = vmul.f32 %v1494, 0.2
      %v1817 = vmul.f32 %v1495, 0.2
      %v1818 = vmul.f32 %v1625, 0.2
      %v1819 = vmul.f32 %v1626, 0.2
      %v1820 = vmul.f32 %v1627, 0.2
      %v1821 = vmul.f32 %v1628, 0.2
      %v1822 = vmul.f32 %v1629, 0.2
      %v1823 = vmul.f32 %v1630, 0.2
      %v1824 = vmul.f32 %v1631, 0.2
      %v1825 = vmul.f32 %v1632, 0.2
      %v1826 = vmul.f32 %v1762, 0.2
      %v1827 = vmul.f32 %v1763, 0.2
      %v1828 = vmul.f32 %v1764, 0.2
      %v1829 = vmul.f32 %v1765, 0.2
      %v1830 = vmul.f32 %v1766, 0.2
      %v1831 = vmul.f32 %v1767, 0.2
      %v1832 = vmul.f32 %v1768, 0.2
      %v1833 = vmul.f32 %v1769, 0.2
      %v1834 = vsel %vm1770, %v1347, %v1802
      %v1835 = vsel %vm1771, %v1348, %v1803
      %v1836 = vsel %vm1772, %v1349, %v1804
      %v1837 = vsel %vm1773, %v1350, %v1805
      %v1838 = vsel %vm1774, %v1351, %v1806
      %v1839 = vsel %vm1775, %v1352, %v1807
      %v1840 = vsel %vm1776, %v1353, %v1808
      %v1841 = vsel %vm1777, %v1354, %v1809
      %v1842 = vsel %vm1778, %v1488, %v1810
      %v1843 = vsel %vm1779, %v1489, %v1811
      %v1844 = vsel %vm1780, %v1490, %v1812
      %v1845 = vsel %vm1781, %v1491, %v1813
      %v1846 = vsel %vm1782, %v1492, %v1814
      %v1847 = vsel %vm1783, %v1493, %v1815
      %v1848 = vsel %vm1784, %v1494, %v1816
      %v1849 = vsel %vm1785, %v1495, %v1817
      %v1850 = vsel %vm1786, %v1625, %v1818
      %v1851 = vsel %vm1787, %v1626, %v1819
      %v1852 = vsel %vm1788, %v1627, %v1820
      %v1853 = vsel %vm1789, %v1628, %v1821
      %v1854 = vsel %vm1790, %v1629, %v1822
      %v1855 = vsel %vm1791, %v1630, %v1823
      %v1856 = vsel %vm1792, %v1631, %v1824
      %v1857 = vsel %vm1793, %v1632, %v1825
      %v1858 = vsel %vm1794, %v1762, %v1826
      %v1859 = vsel %vm1795, %v1763, %v1827
      %v1860 = vsel %vm1796, %v1764, %v1828
      %v1861 = vsel %vm1797, %v1765, %v1829
      %v1862 = vsel %vm1798, %v1766, %v1830
      %v1863 = vsel %vm1799, %v1767, %v1831
      %v1864 = vsel %vm1800, %v1768, %v1832
      %v1865 = vsel %vm1801, %v1769, %v1833
      %v1866 = vadd.f32 %v1834, %v1205
      %v1867 = vadd.f32 %v1835, %v1206
      %v1868 = vadd.f32 %v1836, %v1207
      %v1869 = vadd.f32 %v1837, %v1208
      %v1870 = vadd.f32 %v1838, %v1209
      %v1871 = vadd.f32 %v1839, %v1210
      %v1872 = vadd.f32 %v1840, %v1211
      %v1873 = vadd.f32 %v1841, %v1212
      %v1874 = vadd.f32 %v1842, %v1205
      %v1875 = vadd.f32 %v1843, %v1206
      %v1876 = vadd.f32 %v1844, %v1207
      %v1877 = vadd.f32 %v1845, %v1208
      %v1878 = vadd.f32 %v1846, %v1209
      %v1879 = vadd.f32 %v1847, %v1210
      %v1880 = vadd.f32 %v1848, %v1211
      %v1881 = vadd.f32 %v1849, %v1212
      %v1882 = vadd.f32 %v1850, %v1205
      %v1883 = vadd.f32 %v1851, %v1206
      %v1884 = vadd.f32 %v1852, %v1207
      %v1885 = vadd.f32 %v1853, %v1208
      %v1886 = vadd.f32 %v1854, %v1209
      %v1887 = vadd.f32 %v1855, %v1210
      %v1888 = vadd.f32 %v1856, %v1211
      %v1889 = vadd.f32 %v1857, %v1212
      %v1890 = vadd.f32 %v1858, %v1205
      %v1891 = vadd.f32 %v1859, %v1206
      %v1892 = vadd.f32 %v1860, %v1207
      %v1893 = vadd.f32 %v1861, %v1208
      %v1894 = vadd.f32 %v1862, %v1209
      %v1895 = vadd.f32 %v1863, %v1210
      %v1896 = vadd.f32 %v1864, %v1211
      %v1897 = vadd.f32 %v1865, %v1212
      %vm1898 = vcmask 523264
      %v1899 = vsel %vm1898, %v1866, -inf
      %1900 = vmax.xlane.f32.xlu0 %v1899
      %v1901 = vpop.xlane.xlu0 %1900
      %v1902 = vsel %vm1898, %v1867, -inf
      %1903 = vmax.xlane.f32.xlu0 %v1902
      %v1904 = vpop.xlane.xlu0 %1903
      %v1905 = vsel %vm1898, %v1868, -inf
      %1906 = vmax.xlane.f32.xlu0 %v1905
      %v1907 = vpop.xlane.xlu0 %1906
      %v1908 = vsel %vm1898, %v1869, -inf
      %1909 = vmax.xlane.f32.xlu0 %v1908
      %v1910 = vpop.xlane.xlu0 %1909
      %v1911 = vsel %vm1898, %v1870, -inf
      %1912 = vmax.xlane.f32.xlu0 %v1911
      %v1913 = vpop.xlane.xlu0 %1912
      %v1914 = vsel %vm1898, %v1871, -inf
      %1915 = vmax.xlane.f32.xlu0 %v1914
      %v1916 = vpop.xlane.xlu0 %1915
      %v1917 = vsel %vm1898, %v1872, -inf
      %1918 = vmax.xlane.f32.xlu0 %v1917
      %v1919 = vpop.xlane.xlu0 %1918
      %v1920 = vsel %vm1898, %v1873, -inf
      %1921 = vmax.xlane.f32.xlu0 %v1920
      %v1922 = vpop.xlane.xlu0 %1921
      %v1923 = vsel %vm1898, %v1874, -inf
      %1924 = vmax.xlane.f32.xlu0 %v1923
      %v1925 = vpop.xlane.xlu0 %1924
      %v1926 = vsel %vm1898, %v1875, -inf
      %1927 = vmax.xlane.f32.xlu0 %v1926
      %v1928 = vpop.xlane.xlu0 %1927
      %v1929 = vsel %vm1898, %v1876, -inf
      %1930 = vmax.xlane.f32.xlu0 %v1929
      %v1931 = vpop.xlane.xlu0 %1930
      %v1932 = vsel %vm1898, %v1877, -inf
      %1933 = vmax.xlane.f32.xlu0 %v1932
      %v1934 = vpop.xlane.xlu0 %1933
      %v1935 = vsel %vm1898, %v1878, -inf
      %1936 = vmax.xlane.f32.xlu0 %v1935
      %v1937 = vpop.xlane.xlu0 %1936
      %v1938 = vsel %vm1898, %v1879, -inf
      %1939 = vmax.xlane.f32.xlu0 %v1938
      %v1940 = vpop.xlane.xlu0 %1939
      %v1941 = vsel %vm1898, %v1880, -inf
      %1942 = vmax.xlane.f32.xlu0 %v1941
      %v1943 = vpop.xlane.xlu0 %1942
      %v1944 = vsel %vm1898, %v1881, -inf
      %1945 = vmax.xlane.f32.xlu0 %v1944
      %v1946 = vpop.xlane.xlu0 %1945
      %v1947 = vsel %vm1898, %v1882, -inf
      %1948 = vmax.xlane.f32.xlu0 %v1947
      %v1949 = vpop.xlane.xlu0 %1948
      %v1950 = vsel %vm1898, %v1883, -inf
      %1951 = vmax.xlane.f32.xlu0 %v1950
      %v1952 = vpop.xlane.xlu0 %1951
      %v1953 = vsel %vm1898, %v1884, -inf
      %1954 = vmax.xlane.f32.xlu0 %v1953
      %v1955 = vpop.xlane.xlu0 %1954
      %v1956 = vsel %vm1898, %v1885, -inf
      %1957 = vmax.xlane.f32.xlu0 %v1956
      %v1958 = vpop.xlane.xlu0 %1957
      %v1959 = vsel %vm1898, %v1886, -inf
      %1960 = vmax.xlane.f32.xlu0 %v1959
      %v1961 = vpop.xlane.xlu0 %1960
      %v1962 = vsel %vm1898, %v1887, -inf
      %1963 = vmax.xlane.f32.xlu0 %v1962
      %v1964 = vpop.xlane.xlu0 %1963
      %v1965 = vsel %vm1898, %v1888, -inf
      %1966 = vmax.xlane.f32.xlu0 %v1965
      %v1967 = vpop.xlane.xlu0 %1966
      %v1968 = vsel %vm1898, %v1889, -inf
      %1969 = vmax.xlane.f32.xlu0 %v1968
      %v1970 = vpop.xlane.xlu0 %1969
      %v1971 = vsel %vm1898, %v1890, -inf
      %1972 = vmax.xlane.f32.xlu0 %v1971
      %v1973 = vpop.xlane.xlu0 %1972
      %v1974 = vsel %vm1898, %v1891, -inf
      %1975 = vmax.xlane.f32.xlu0 %v1974
      %v1976 = vpop.xlane.xlu0 %1975
      %v1977 = vsel %vm1898, %v1892, -inf
      %1978 = vmax.xlane.f32.xlu0 %v1977
      %v1979 = vpop.xlane.xlu0 %1978
      %v1980 = vsel %vm1898, %v1893, -inf
      %1981 = vmax.xlane.f32.xlu0 %v1980
      %v1982 = vpop.xlane.xlu0 %1981
      %v1983 = vsel %vm1898, %v1894, -inf
      %1984 = vmax.xlane.f32.xlu0 %v1983
      %v1985 = vpop.xlane.xlu0 %1984
      %v1986 = vsel %vm1898, %v1895, -inf
      %1987 = vmax.xlane.f32.xlu0 %v1986
      %v1988 = vpop.xlane.xlu0 %1987
      %v1989 = vsel %vm1898, %v1896, -inf
      %1990 = vmax.xlane.f32.xlu0 %v1989
      %v1991 = vpop.xlane.xlu0 %1990
      %v1992 = vsel %vm1898, %v1897, -inf
      %1993 = vmax.xlane.f32.xlu0 %v1992
      %v1994 = vpop.xlane.xlu0 %1993
      %v1995 = vsub.f32 %v1866, %v1901
      %v1996 = vsub.f32 %v1867, %v1904
      %v1997 = vsub.f32 %v1868, %v1907
      %v1998 = vsub.f32 %v1869, %v1910
      %v1999 = vsub.f32 %v1870, %v1913
      %v2000 = vsub.f32 %v1871, %v1916
      %v2001 = vsub.f32 %v1872, %v1919
      %v2002 = vsub.f32 %v1873, %v1922
      %v2003 = vsub.f32 %v1874, %v1925
      %v2004 = vsub.f32 %v1875, %v1928
      %v2005 = vsub.f32 %v1876, %v1931
      %v2006 = vsub.f32 %v1877, %v1934
      %v2007 = vsub.f32 %v1878, %v1937
      %v2008 = vsub.f32 %v1879, %v1940
      %v2009 = vsub.f32 %v1880, %v1943
      %v2010 = vsub.f32 %v1881, %v1946
      %v2011 = vsub.f32 %v1882, %v1949
      %v2012 = vsub.f32 %v1883, %v1952
      %v2013 = vsub.f32 %v1884, %v1955
      %v2014 = vsub.f32 %v1885, %v1958
      %v2015 = vsub.f32 %v1886, %v1961
      %v2016 = vsub.f32 %v1887, %v1964
      %v2017 = vsub.f32 %v1888, %v1967
      %v2018 = vsub.f32 %v1889, %v1970
      %v2019 = vsub.f32 %v1890, %v1973
      %v2020 = vsub.f32 %v1891, %v1976
      %v2021 = vsub.f32 %v1892, %v1979
      %v2022 = vsub.f32 %v1893, %v1982
      %v2023 = vsub.f32 %v1894, %v1985
      %v2024 = vsub.f32 %v1895, %v1988
      %v2025 = vsub.f32 %v1896, %v1991
      %v2026 = vsub.f32 %v1897, %v1994
      %v2027 = vmul.f32 %v1995, 1.442695
      %v2028 = vpow.pop %v2027
      %v2029 = vmul.f32 %v1996, 1.442695
      %v2030 = vpow.pop %v2029
      %v2031 = vmul.f32 %v1997, 1.442695
      %v2032 = vpow.pop %v2031
      %v2033 = vmul.f32 %v1998, 1.442695
      %v2034 = vpow.pop %v2033
      %v2035 = vmul.f32 %v1999, 1.442695
      %v2036 = vpow.pop %v2035
      %v2037 = vmul.f32 %v2000, 1.442695
      %v2038 = vpow.pop %v2037
      %v2039 = vmul.f32 %v2001, 1.442695
      %v2040 = vpow.pop %v2039
      %v2041 = vmul.f32 %v2002, 1.442695
      %v2042 = vpow.pop %v2041
      %v2043 = vmul.f32 %v2003, 1.442695
      %v2044 = vpow.pop %v2043
      %v2045 = vmul.f32 %v2004, 1.442695
      %v2046 = vpow.pop %v2045
      %v2047 = vmul.f32 %v2005, 1.442695
      %v2048 = vpow.pop %v2047
      %v2049 = vmul.f32 %v2006, 1.442695
      %v2050 = vpow.pop %v2049
      %v2051 = vmul.f32 %v2007, 1.442695
      %v2052 = vpow.pop %v2051
      %v2053 = vmul.f32 %v2008, 1.442695
      %v2054 = vpow.pop %v2053
      %v2055 = vmul.f32 %v2009, 1.442695
      %v2056 = vpow.pop %v2055
      %v2057 = vmul.f32 %v2010, 1.442695
      %v2058 = vpow.pop %v2057
      %v2059 = vmul.f32 %v2011, 1.442695
      %v2060 = vpow.pop %v2059
      %v2061 = vmul.f32 %v2012, 1.442695
      %v2062 = vpow.pop %v2061
      %v2063 = vmul.f32 %v2013, 1.442695
      %v2064 = vpow.pop %v2063
      %v2065 = vmul.f32 %v2014, 1.442695
      %v2066 = vpow.pop %v2065
      %v2067 = vmul.f32 %v2015, 1.442695
      %v2068 = vpow.pop %v2067
      %v2069 = vmul.f32 %v2016, 1.442695
      %v2070 = vpow.pop %v2069
      %v2071 = vmul.f32 %v2017, 1.442695
      %v2072 = vpow.pop %v2071
      %v2073 = vmul.f32 %v2018, 1.442695
      %v2074 = vpow.pop %v2073
      %v2075 = vmul.f32 %v2019, 1.442695
      %v2076 = vpow.pop %v2075
      %v2077 = vmul.f32 %v2020, 1.442695
      %v2078 = vpow.pop %v2077
      %v2079 = vmul.f32 %v2021, 1.442695
      %v2080 = vpow.pop %v2079
      %v2081 = vmul.f32 %v2022, 1.442695
      %v2082 = vpow.pop %v2081
      %v2083 = vmul.f32 %v2023, 1.442695
      %v2084 = vpow.pop %v2083
      %v2085 = vmul.f32 %v2024, 1.442695
      %v2086 = vpow.pop %v2085
      %v2087 = vmul.f32 %v2025, 1.442695
      %v2088 = vpow.pop %v2087
      %v2089 = vmul.f32 %v2026, 1.442695
      %v2090 = vpow.pop %v2089
      %v2091 = vsel %vm1898, %v2028, 0.0
      %2092 = vadd.xlane.f32.xlu0 %v2091
      %v2093 = vpop.xlane.xlu0 %2092
      %v2094 = vsel %vm1898, %v2030, 0.0
      %2095 = vadd.xlane.f32.xlu0 %v2094
      %v2096 = vpop.xlane.xlu0 %2095
      %v2097 = vsel %vm1898, %v2032, 0.0
      %2098 = vadd.xlane.f32.xlu0 %v2097
      %v2099 = vpop.xlane.xlu0 %2098
      %v2100 = vsel %vm1898, %v2034, 0.0
      %2101 = vadd.xlane.f32.xlu0 %v2100
      %v2102 = vpop.xlane.xlu0 %2101
      %v2103 = vsel %vm1898, %v2036, 0.0
      %2104 = vadd.xlane.f32.xlu0 %v2103
      %v2105 = vpop.xlane.xlu0 %2104
      %v2106 = vsel %vm1898, %v2038, 0.0
      %2107 = vadd.xlane.f32.xlu0 %v2106
      %v2108 = vpop.xlane.xlu0 %2107
      %v2109 = vsel %vm1898, %v2040, 0.0
      %2110 = vadd.xlane.f32.xlu0 %v2109
      %v2111 = vpop.xlane.xlu0 %2110
      %v2112 = vsel %vm1898, %v2042, 0.0
      %2113 = vadd.xlane.f32.xlu0 %v2112
      %v2114 = vpop.xlane.xlu0 %2113
      %v2115 = vsel %vm1898, %v2044, 0.0
      %2116 = vadd.xlane.f32.xlu0 %v2115
      %v2117 = vpop.xlane.xlu0 %2116
      %v2118 = vsel %vm1898, %v2046, 0.0
      %2119 = vadd.xlane.f32.xlu0 %v2118
      %v2120 = vpop.xlane.xlu0 %2119
      %v2121 = vsel %vm1898, %v2048, 0.0
      %2122 = vadd.xlane.f32.xlu0 %v2121
      %v2123 = vpop.xlane.xlu0 %2122
      %v2124 = vsel %vm1898, %v2050, 0.0
      %2125 = vadd.xlane.f32.xlu0 %v2124
      %v2126 = vpop.xlane.xlu0 %2125
      %v2127 = vsel %vm1898, %v2052, 0.0
      %2128 = vadd.xlane.f32.xlu0 %v2127
      %v2129 = vpop.xlane.xlu0 %2128
      %v2130 = vsel %vm1898, %v2054, 0.0
      %2131 = vadd.xlane.f32.xlu0 %v2130
      %v2132 = vpop.xlane.xlu0 %2131
      %v2133 = vsel %vm1898, %v2056, 0.0
      %2134 = vadd.xlane.f32.xlu0 %v2133
      %v2135 = vpop.xlane.xlu0 %2134
      %v2136 = vsel %vm1898, %v2058, 0.0
      %2137 = vadd.xlane.f32.xlu0 %v2136
      %v2138 = vpop.xlane.xlu0 %2137
      %v2139 = vsel %vm1898, %v2060, 0.0
      %2140 = vadd.xlane.f32.xlu0 %v2139
      %v2141 = vpop.xlane.xlu0 %2140
      %v2142 = vsel %vm1898, %v2062, 0.0
      %2143 = vadd.xlane.f32.xlu0 %v2142
      %v2144 = vpop.xlane.xlu0 %2143
      %v2145 = vsel %vm1898, %v2064, 0.0
      %2146 = vadd.xlane.f32.xlu0 %v2145
      %v2147 = vpop.xlane.xlu0 %2146
      %v2148 = vsel %vm1898, %v2066, 0.0
      %2149 = vadd.xlane.f32.xlu0 %v2148
      %v2150 = vpop.xlane.xlu0 %2149
      %v2151 = vsel %vm1898, %v2068, 0.0
      %2152 = vadd.xlane.f32.xlu0 %v2151
      %v2153 = vpop.xlane.xlu0 %2152
      %v2154 = vsel %vm1898, %v2070, 0.0
      %2155 = vadd.xlane.f32.xlu0 %v2154
      %v2156 = vpop.xlane.xlu0 %2155
      %v2157 = vsel %vm1898, %v2072, 0.0
      %2158 = vadd.xlane.f32.xlu0 %v2157
      %v2159 = vpop.xlane.xlu0 %2158
      %v2160 = vsel %vm1898, %v2074, 0.0
      %2161 = vadd.xlane.f32.xlu0 %v2160
      %v2162 = vpop.xlane.xlu0 %2161
      %v2163 = vsel %vm1898, %v2076, 0.0
      %2164 = vadd.xlane.f32.xlu0 %v2163
      %v2165 = vpop.xlane.xlu0 %2164
      %v2166 = vsel %vm1898, %v2078, 0.0
      %2167 = vadd.xlane.f32.xlu0 %v2166
      %v2168 = vpop.xlane.xlu0 %2167
      %v2169 = vsel %vm1898, %v2080, 0.0
      %2170 = vadd.xlane.f32.xlu0 %v2169
      %v2171 = vpop.xlane.xlu0 %2170
      %v2172 = vsel %vm1898, %v2082, 0.0
      %2173 = vadd.xlane.f32.xlu0 %v2172
      %v2174 = vpop.xlane.xlu0 %2173
      %v2175 = vsel %vm1898, %v2084, 0.0
      %2176 = vadd.xlane.f32.xlu0 %v2175
      %v2177 = vpop.xlane.xlu0 %2176
      %v2178 = vsel %vm1898, %v2086, 0.0
      %2179 = vadd.xlane.f32.xlu0 %v2178
      %v2180 = vpop.xlane.xlu0 %2179
      %v2181 = vsel %vm1898, %v2088, 0.0
      %2182 = vadd.xlane.f32.xlu0 %v2181
      %v2183 = vpop.xlane.xlu0 %2182
      %v2184 = vsel %vm1898, %v2090, 0.0
      %2185 = vadd.xlane.f32.xlu0 %v2184
      %v2186 = vpop.xlane.xlu0 %2185
      %v2187 = vrcp.pop %v2093
      %v2188 = vrcp.pop %v2096
      %v2189 = vrcp.pop %v2099
      %v2190 = vrcp.pop %v2102
      %v2191 = vrcp.pop %v2105
      %v2192 = vrcp.pop %v2108
      %v2193 = vrcp.pop %v2111
      %v2194 = vrcp.pop %v2114
      %v2195 = vrcp.pop %v2117
      %v2196 = vrcp.pop %v2120
      %v2197 = vrcp.pop %v2123
      %v2198 = vrcp.pop %v2126
      %v2199 = vrcp.pop %v2129
      %v2200 = vrcp.pop %v2132
      %v2201 = vrcp.pop %v2135
      %v2202 = vrcp.pop %v2138
      %v2203 = vrcp.pop %v2141
      %v2204 = vrcp.pop %v2144
      %v2205 = vrcp.pop %v2147
      %v2206 = vrcp.pop %v2150
      %v2207 = vrcp.pop %v2153
      %v2208 = vrcp.pop %v2156
      %v2209 = vrcp.pop %v2159
      %v2210 = vrcp.pop %v2162
      %v2211 = vrcp.pop %v2165
      %v2212 = vrcp.pop %v2168
      %v2213 = vrcp.pop %v2171
      %v2214 = vrcp.pop %v2174
      %v2215 = vrcp.pop %v2177
      %v2216 = vrcp.pop %v2180
      %v2217 = vrcp.pop %v2183
      %v2218 = vrcp.pop %v2186
      %v2219 = vmul.f32 %v2028, %v2187
      %v2220 = vmul.f32 %v2030, %v2188
      %v2221 = vmul.f32 %v2032, %v2189
      %v2222 = vmul.f32 %v2034, %v2190
      %v2223 = vmul.f32 %v2036, %v2191
      %v2224 = vmul.f32 %v2038, %v2192
      %v2225 = vmul.f32 %v2040, %v2193
      %v2226 = vmul.f32 %v2042, %v2194
      %v2227 = vmul.f32 %v2044, %v2195
      %v2228 = vmul.f32 %v2046, %v2196
      %v2229 = vmul.f32 %v2048, %v2197
      %v2230 = vmul.f32 %v2050, %v2198
      %v2231 = vmul.f32 %v2052, %v2199
      %v2232 = vmul.f32 %v2054, %v2200
      %v2233 = vmul.f32 %v2056, %v2201
      %v2234 = vmul.f32 %v2058, %v2202
      %v2235 = vmul.f32 %v2060, %v2203
      %v2236 = vmul.f32 %v2062, %v2204
      %v2237 = vmul.f32 %v2064, %v2205
      %v2238 = vmul.f32 %v2066, %v2206
      %v2239 = vmul.f32 %v2068, %v2207
      %v2240 = vmul.f32 %v2070, %v2208
      %v2241 = vmul.f32 %v2072, %v2209
      %v2242 = vmul.f32 %v2074, %v2210
      %v2243 = vmul.f32 %v2076, %v2211
      %v2244 = vmul.f32 %v2078, %v2212
      %v2245 = vmul.f32 %v2080, %v2213
      %v2246 = vmul.f32 %v2082, %v2214
      %v2247 = vmul.f32 %v2084, %v2215
      %v2248 = vmul.f32 %v2086, %v2216
      %v2249 = vmul.f32 %v2088, %v2217
      %v2250 = vmul.f32 %v2090, %v2218
      %v2251 = vpack.c.bf16 %v2220, %v2219
      %v2252 = vpack.c.bf16 %v2222, %v2221
      %v2253 = vpack.c.bf16 %v2224, %v2223
      %v2254 = vpack.c.bf16 %v2226, %v2225
      %v2255 = vpack.c.bf16 %v2228, %v2227
      %v2256 = vpack.c.bf16 %v2230, %v2229
      %v2257 = vpack.c.bf16 %v2232, %v2231
      %v2258 = vpack.c.bf16 %v2234, %v2233
      %v2259 = vpack.c.bf16 %v2236, %v2235
      %v2260 = vpack.c.bf16 %v2238, %v2237
      %v2261 = vpack.c.bf16 %v2240, %v2239
      %v2262 = vpack.c.bf16 %v2242, %v2241
      %v2263 = vpack.c.bf16 %v2244, %v2243
      %v2264 = vpack.c.bf16 %v2246, %v2245
      %v2265 = vpack.c.bf16 %v2248, %v2247
      %v2266 = vpack.c.bf16 %v2250, %v2249
      %vm2267 = vcmp.ge.s32.totalorder %v1196, 0
      %vm2268 = vcmp.lt.s32.totalorder %v1196, 8
      %vm2269 = vmand %vm2267, %vm2268
      %v2270 = vsel %vm2269, %v539, 0.0
      %v2271 = vsel %vm2269, %v542, 0.0
      %v2272 = vsel %vm2269, %v547, 0.0
      %v2273 = vsel %vm2269, %v550, 0.0
      %v2274 = vsel %vm2269, %v555, 0.0
      %v2275 = vsel %vm2269, %v558, 0.0
      %v2276 = vsel %vm2269, %v563, 0.0
      %v2277 = vsel %vm2269, %v566, 0.0
      %v2278 = vpack.c.bf16 %v2271, %v2270
      %v2279 = vpack.c.bf16 %v2273, %v2272
      %v2280 = vpack.c.bf16 %v2275, %v2274
      %v2281 = vpack.c.bf16 %v2277, %v2276
      %vm2282 = vcmp.ge.s32.totalorder %v1196, 8
      %vm2283 = vcmp.lt.s32.totalorder %v1196, 16
      %vm2284 = vmand %vm2282, %vm2283
      %v2285 = vsel %vm2284, %v539, 0.0
      %v2286 = vsel %vm2284, %v542, 0.0
      %v2287 = vsel %vm2284, %v547, 0.0
      %v2288 = vsel %vm2284, %v550, 0.0
      %v2289 = vsel %vm2284, %v555, 0.0
      %v2290 = vsel %vm2284, %v558, 0.0
      %v2291 = vsel %vm2284, %v563, 0.0
      %v2292 = vsel %vm2284, %v566, 0.0
      %v2293 = vpack.c.bf16 %v2286, %v2285
      %v2294 = vpack.c.bf16 %v2288, %v2287
      %v2295 = vpack.c.bf16 %v2290, %v2289
      %v2296 = vpack.c.bf16 %v2292, %v2291
      %vm2297 = vcmp.ge.s32.totalorder %v1196, 16
      %vm2298 = vcmp.lt.s32.totalorder %v1196, 24
      %vm2299 = vmand %vm2297, %vm2298
      %v2300 = vsel %vm2299, %v539, 0.0
      %v2301 = vsel %vm2299, %v542, 0.0
      %v2302 = vsel %vm2299, %v547, 0.0
      %v2303 = vsel %vm2299, %v550, 0.0
      %v2304 = vsel %vm2299, %v555, 0.0
      %v2305 = vsel %vm2299, %v558, 0.0
      %v2306 = vsel %vm2299, %v563, 0.0
      %v2307 = vsel %vm2299, %v566, 0.0
      %v2308 = vpack.c.bf16 %v2301, %v2300
      %v2309 = vpack.c.bf16 %v2303, %v2302
      %v2310 = vpack.c.bf16 %v2305, %v2304
      %v2311 = vpack.c.bf16 %v2307, %v2306
      %vm2312 = vcmp.ge.s32.totalorder %v1196, 24
      %vm2313 = vcmp.lt.s32.totalorder %v1196, 32
      %vm2314 = vmand %vm2312, %vm2313
      %v2315 = vsel %vm2314, %v539, 0.0
      %v2316 = vsel %vm2314, %v542, 0.0
      %v2317 = vsel %vm2314, %v547, 0.0
      %v2318 = vsel %vm2314, %v550, 0.0
      %v2319 = vsel %vm2314, %v555, 0.0
      %v2320 = vsel %vm2314, %v558, 0.0
      %v2321 = vsel %vm2314, %v563, 0.0
      %v2322 = vsel %vm2314, %v566, 0.0
      %v2323 = vpack.c.bf16 %v2316, %v2315
      %v2324 = vpack.c.bf16 %v2318, %v2317
      %v2325 = vpack.c.bf16 %v2320, %v2319
      %v2326 = vpack.c.bf16 %v2322, %v2321
      %2331 = vrot.lane.b32.xlu0 %v2255, 64
      %v2332 = vpop.permute.xlu0 %2331
      %2333 = vrot.lane.b32.xlu0 %v2256, 64
      %v2334 = vpop.permute.xlu0 %2333
      %2335 = vrot.lane.b32.xlu0 %v2257, 64
      %v2336 = vpop.permute.xlu0 %2335
      %2337 = vrot.lane.b32.xlu0 %v2258, 64
      %v2338 = vpop.permute.xlu0 %2337
      %2343 = vrot.lane.b32.xlu0 %v2263, 64
      %v2344 = vpop.permute.xlu0 %2343
      %2345 = vrot.lane.b32.xlu0 %v2264, 64
      %v2346 = vpop.permute.xlu0 %2345
      %2347 = vrot.lane.b32.xlu0 %v2265, 64
      %v2348 = vpop.permute.xlu0 %2347
      %2349 = vrot.lane.b32.xlu0 %v2266, 64
      %v2350 = vpop.permute.xlu0 %2349
      %v2353 = vsel %vm1898, %v2251, %v2332
      %v2357 = vsel %vm1898, %v2252, %v2334
      %v2361 = vsel %vm1898, %v2253, %v2336
      %v2365 = vsel %vm1898, %v2254, %v2338
      %v2369 = vsel %vm1898, %v2259, %v2344
      %v2373 = vsel %vm1898, %v2260, %v2346
      %v2377 = vsel %vm1898, %v2261, %v2348
      %v2381 = vsel %vm1898, %v2262, %v2350
      %2383 = vmatprep.subr.bf16.mxu0 0
      %2384 = vmatpush1.bf16.msra.mxu0 %v2278
      %2385 = vmatprep.subr.bf16.mxu0 0
      %2386 = vmatpush1.bf16.msra.mxu0 %v2279
      %2387 = vmatprep.subr.bf16.mxu0 0
      %2388 = vmatpush1.bf16.msra.mxu0 %v2280
      %2389 = vmatprep.subr.bf16.mxu0 0
      %2390 = vmatpush1.bf16.msra.mxu0 %v2281
      %2391 = vmatprep.subr.bf16.mxu0 0
      %2392 = vmatpush1.bf16.msra.mxu0 %v2293
      %2393 = vmatprep.subr.bf16.mxu0 0
      %2394 = vmatpush1.bf16.msra.mxu0 %v2294
      %2395 = vmatprep.subr.bf16.mxu0 0
      %2396 = vmatpush1.bf16.msra.mxu0 %v2295
      %2397 = vmatprep.subr.bf16.mxu0 0
      %2398 = vmatpush1.bf16.msra.mxu0 %v2296
      %2399 = vmatprep.subr.bf16.mxu0 0
      %2400 = vmatpush1.bf16.msra.mxu0 %v2308
      %2401 = vmatprep.subr.bf16.mxu0 0
      %2402 = vmatpush1.bf16.msra.mxu0 %v2309
      %2403 = vmatprep.subr.bf16.mxu0 0
      %2404 = vmatpush1.bf16.msra.mxu0 %v2310
      %2405 = vmatprep.subr.bf16.mxu0 0
      %2406 = vmatpush1.bf16.msra.mxu0 %v2311
      %2407 = vmatprep.subr.bf16.mxu0 0
      %2408 = vmatpush1.bf16.msra.mxu0 %v2323
      %2409 = vmatprep.subr.bf16.mxu0 0
      %2410 = vmatpush1.bf16.msra.mxu0 %v2324
      %2411 = vmatprep.subr.bf16.mxu0 0
      %2412 = vmatpush1.bf16.msra.mxu0 %v2325
      %2413 = vmatprep.subr.bf16.mxu0 0
      %2414 = vmatpush1.bf16.msra.mxu0 %v2326
      %2415 = vmatprep.mubr.bf16.mxu0 %v2369
      %2416 = vmatmul.mubr.bf16.gmra.mrb[0].mxu0 %v2353
      %v2417 = vpop.f32.mrb[0].mxu0
      %v2418 = vadd.f32 0.0, %v2417
      %v2419 = vpop.f32.mrb[0].mxu0
      %v2420 = vpop.f32.mrb[0].mxu0
      %v2421 = vadd.f32 0.0, %v2420
      %v2422 = vpop.f32.mrb[0].mxu0
      %2423 = vmatprep.mubr.bf16.mxu0 %v2373
      %2424 = vmatmul.mubr.bf16.gmra.mrb[0].mxu0 %v2357
      %v2425 = vpop.f32.mrb[0].mxu0
      %v2426 = vadd.f32 0.0, %v2425
      %v2427 = vpop.f32.mrb[0].mxu0
      %v2428 = vpop.f32.mrb[0].mxu0
      %v2429 = vadd.f32 0.0, %v2428
      %v2430 = vpop.f32.mrb[0].mxu0
      %2431 = vmatprep.mubr.bf16.mxu0 %v2377
      %2432 = vmatmul.mubr.bf16.gmra.mrb[0].mxu0 %v2361
      %v2433 = vpop.f32.mrb[0].mxu0
      %v2434 = vadd.f32 0.0, %v2433
      %v2435 = vpop.f32.mrb[0].mxu0
      %v2436 = vpop.f32.mrb[0].mxu0
      %v2437 = vadd.f32 0.0, %v2436
      %v2438 = vpop.f32.mrb[0].mxu0
      %2439 = vmatprep.mubr.bf16.mxu0 %v2381
      %2440 = vmatmul.mubr.bf16.gmra.mrb[0].mxu0 %v2365
      %v2441 = vpop.f32.mrb[0].mxu0
      %v2442 = vadd.f32 0.0, %v2441
      %v2443 = vpop.f32.mrb[0].mxu0
      %v2444 = vpop.f32.mrb[0].mxu0
      %v2445 = vadd.f32 0.0, %v2444
      %v2446 = vpop.f32.mrb[0].mxu0
      %2447 = vdwg.mxu0
      %v2448 = vmax.f32 %v2418, 0.0
      %v2449 = vmax.f32 %v2421, 0.0
      %v2450 = vmax.f32 %v2426, 0.0
      %v2451 = vmax.f32 %v2429, 0.0
      %v2452 = vmax.f32 %v2434, 0.0
      %v2453 = vmax.f32 %v2437, 0.0
      %v2454 = vmax.f32 %v2442, 0.0
      %v2455 = vmax.f32 %v2445, 0.0
      %v2456 = vld [vmem:[%s8] sm:$0x1]
      %v2458 = vlaneseq
      %v2459 = vshrl.u32 %v2458, 7
      %v2460 = vsub.s32 0, %v2459
      %v2461 = vrot.slane %v2456, %v2460
      %v2463 = vmul.f32 %v2448, %v2461
      %v2464 = vmul.f32 %v2449, %v2461
      %v2465 = vmul.f32 %v2450, %v2461
      %v2466 = vmul.f32 %v2451, %v2461
      %v2467 = vmul.f32 %v2452, %v2461
      %v2468 = vmul.f32 %v2453, %v2461
      %v2469 = vmul.f32 %v2454, %v2461
      %v2470 = vmul.f32 %v2455, %v2461
      %v2471 = vsel %vm491, %v2463, 0.0
      %2472 = vadd.xlane.f32.xlu0 %v2471
      %v2473 = vpop.xlane.xlu0 %2472
      %v2474 = vsel %vm491, %v2464, 0.0
      %2475 = vadd.xlane.f32.xlu0 %v2474
      %v2476 = vpop.xlane.xlu0 %2475
      %v2477 = vsel %vm491, %v2465, 0.0
      %2478 = vadd.xlane.f32.xlu0 %v2477
      %v2479 = vpop.xlane.xlu0 %2478
      %v2480 = vsel %vm491, %v2466, 0.0
      %2481 = vadd.xlane.f32.xlu0 %v2480
      %v2482 = vpop.xlane.xlu0 %2481
      %v2483 = vsel %vm491, %v2467, 0.0
      %2484 = vadd.xlane.f32.xlu0 %v2483
      %v2485 = vpop.xlane.xlu0 %2484
      %v2486 = vsel %vm491, %v2468, 0.0
      %2487 = vadd.xlane.f32.xlu0 %v2486
      %v2488 = vpop.xlane.xlu0 %2487
      %v2489 = vsel %vm491, %v2469, 0.0
      %2490 = vadd.xlane.f32.xlu0 %v2489
      %v2491 = vpop.xlane.xlu0 %2490
      %v2492 = vsel %vm491, %v2470, 0.0
      %2493 = vadd.xlane.f32.xlu0 %v2492
      %v2494 = vpop.xlane.xlu0 %2493
      %v2495 = vld [vmem:[%s425] sm:$0xff]
      %v2496 = vld [vmem:[%s425 + $0x8] sm:$0xff]
      %v2497 = vld [vmem:[%s425 + $0x10] sm:$0xff]
      %v2498 = vld [vmem:[%s425 + $0x18] sm:$0xff]
      %v2499 = vld [vmem:[%s425 + $0x20] sm:$0xff]
      %v2500 = vld [vmem:[%s425 + $0x28] sm:$0xff]
      %v2501 = vld [vmem:[%s425 + $0x30] sm:$0xff]
      %v2502 = vld [vmem:[%s425 + $0x38] sm:$0xff]
      %v2504 = vsel %vm1898, %v2495, 0
      %v2507 = vsel %vm1898, %v2496, 0
      %v2510 = vsel %vm1898, %v2497, 0
      %v2513 = vsel %vm1898, %v2498, 0
      %v2516 = vsel %vm1898, %v2499, 0
      %v2519 = vsel %vm1898, %v2500, 0
      %v2522 = vsel %vm1898, %v2501, 0
      %v2525 = vsel %vm1898, %v2502, 0
      %2527 = vmatprep.subr.mxu0 0.0
      %2528 = vmatpush1.msra.mxu0 %v2473
      %2529 = vmatprep.subr.mxu0 0.0
      %2530 = vmatpush1.msra.mxu0 %v2476
      %2531 = vmatprep.subr.mxu0 0.0
      %2532 = vmatpush1.msra.mxu0 %v2479
      %2533 = vmatprep.subr.mxu0 0.0
      %2534 = vmatpush1.msra.mxu0 %v2482
      %2535 = vmatprep.subr.mxu0 0.0
      %2536 = vmatpush1.msra.mxu0 %v2485
      %2537 = vmatprep.subr.mxu0 0.0
      %2538 = vmatpush1.msra.mxu0 %v2488
      %2539 = vmatprep.subr.mxu0 0.0
      %2540 = vmatpush1.msra.mxu0 %v2491
      %2541 = vmatprep.subr.mxu0 0.0
      %2542 = vmatpush1.msra.mxu0 %v2494
      %2543 = vmatprep.subr.mxu0 0.0
      %2544 = vmatpush1.msra.mxu0 0.0
      %2545 = vmatprep.subr.mxu0 0.0
      %2546 = vmatpush1.msra.mxu0 0.0
      %2547 = vmatprep.subr.mxu0 0.0
      %2548 = vmatpush1.msra.mxu0 0.0
      %2549 = vmatprep.subr.mxu0 0.0
      %2550 = vmatpush1.msra.mxu0 0.0
      %2551 = vmatprep.subr.mxu0 0.0
      %2552 = vmatpush1.msra.mxu0 0.0
      %2553 = vmatprep.subr.mxu0 0.0
      %2554 = vmatpush1.msra.mxu0 0.0
      %2555 = vmatprep.subr.mxu0 0.0
      %2556 = vmatpush1.msra.mxu0 0.0
      %2557 = vmatprep.subr.mxu0 0.0
      %2558 = vmatpush1.msra.mxu0 0.0
      %2559 = vmatprep.subr.mxu0 0.0
      %2560 = vmatpush1.msra.mxu0 0.0
      %2561 = vmatprep.subr.mxu0 0.0
      %2562 = vmatpush1.msra.mxu0 0.0
      %2563 = vmatprep.subr.mxu0 0.0
      %2564 = vmatpush1.msra.mxu0 0.0
      %2565 = vmatprep.subr.mxu0 0.0
      %2566 = vmatpush1.msra.mxu0 0.0
      %2567 = vmatprep.subr.mxu0 0.0
      %2568 = vmatpush1.msra.mxu0 0.0
      %2569 = vmatprep.subr.mxu0 0.0
      %2570 = vmatpush1.msra.mxu0 0.0
      %2571 = vmatprep.subr.mxu0 0.0
      %2572 = vmatpush1.msra.mxu0 0.0
      %2573 = vmatprep.subr.mxu0 0.0
      %2574 = vmatpush1.msra.mxu0 0.0
      %2575 = vmatprep.subr.mxu0 0.0
      %2576 = vmatpush1.msra.mxu0 0.0
      %2577 = vmatprep.subr.mxu0 0.0
      %2578 = vmatpush1.msra.mxu0 0.0
      %2579 = vmatprep.subr.mxu0 0.0
      %2580 = vmatpush1.msra.mxu0 0.0
      %2581 = vmatprep.subr.mxu0 0.0
      %2582 = vmatpush1.msra.mxu0 0.0
      %2583 = vmatprep.subr.mxu0 0.0
      %2584 = vmatpush1.msra.mxu0 0.0
      %2585 = vmatprep.subr.mxu0 0.0
      %2586 = vmatpush1.msra.mxu0 0.0
      %2587 = vmatprep.subr.mxu0 0.0
      %2588 = vmatpush1.msra.mxu0 0.0
      %2589 = vmatprep.subr.mxu0 0.0
      %2590 = vmatpush1.msra.mxu0 0.0
      %2591 = vmatprep.mubr.f32.mxu0 0.0
      %2592 = vmatmul.mubr.f32.gmra.mrb[0].mxu0 %v2504
      %v2593 = vpop.f32.mrb[0].mxu0
      %v2594 = vadd.f32 0.0, %v2593
      %v2595 = vpop.f32.mrb[0].mxu0
      %2596 = vmatprep.mubr.f32.mxu0 0.0
      %2597 = vmatmul.mubr.f32.gmra.mrb[0].mxu0 %v2507
      %v2598 = vpop.f32.mrb[0].mxu0
      %v2599 = vadd.f32 0.0, %v2598
      %v2600 = vpop.f32.mrb[0].mxu0
      %2601 = vmatprep.mubr.f32.mxu0 0.0
      %2602 = vmatmul.mubr.f32.gmra.mrb[0].mxu0 %v2510
      %v2603 = vpop.f32.mrb[0].mxu0
      %v2604 = vadd.f32 0.0, %v2603
      %v2605 = vpop.f32.mrb[0].mxu0
      %2606 = vmatprep.mubr.f32.mxu0 0.0
      %2607 = vmatmul.mubr.f32.gmra.mrb[0].mxu0 %v2513
      %v2608 = vpop.f32.mrb[0].mxu0
      %v2609 = vadd.f32 0.0, %v2608
      %v2610 = vpop.f32.mrb[0].mxu0
      %2611 = vmatprep.mubr.f32.mxu0 0.0
      %2612 = vmatmul.mubr.f32.gmra.mrb[0].mxu0 %v2516
      %v2613 = vpop.f32.mrb[0].mxu0
      %v2614 = vadd.f32 0.0, %v2613
      %v2615 = vpop.f32.mrb[0].mxu0
      %2616 = vmatprep.mubr.f32.mxu0 0.0
      %2617 = vmatmul.mubr.f32.gmra.mrb[0].mxu0 %v2519
      %v2618 = vpop.f32.mrb[0].mxu0
      %v2619 = vadd.f32 0.0, %v2618
      %v2620 = vpop.f32.mrb[0].mxu0
      %2621 = vmatprep.mubr.f32.mxu0 0.0
      %2622 = vmatmul.mubr.f32.gmra.mrb[0].mxu0 %v2522
      %v2623 = vpop.f32.mrb[0].mxu0
      %v2624 = vadd.f32 0.0, %v2623
      %v2625 = vpop.f32.mrb[0].mxu0
      %2626 = vmatprep.mubr.f32.mxu0 0.0
      %2627 = vmatmul.mubr.f32.gmra.mrb[0].mxu0 %v2525
      %v2628 = vpop.f32.mrb[0].mxu0
      %v2629 = vadd.f32 0.0, %v2628
      %v2630 = vpop.f32.mrb[0].mxu0
      %2631 = vdwg.mxu0
      %v2632 = vtanh.pop %v2594
      %v2633 = vtanh.pop %v2599
      %v2634 = vtanh.pop %v2604
      %v2635 = vtanh.pop %v2609
      %v2636 = vtanh.pop %v2614
      %v2637 = vtanh.pop %v2619
      %v2638 = vtanh.pop %v2624
      %v2639 = vtanh.pop %v2629
      %2641 = vset.pattern.permute.xlu0 0
      %2642 = vperm.xlu0 %2641, %v2632
      %v2643 = vpop.permute.xlu0 %2642
      %2646 = vset.pattern.permute.xlu0 0
      %2647 = vperm.xlu0 %2646, %v2633
      %v2648 = vpop.permute.xlu0 %2647
      %2651 = vset.pattern.permute.xlu0 0
      %2652 = vperm.xlu0 %2651, %v2634
      %v2653 = vpop.permute.xlu0 %2652
      %2656 = vset.pattern.permute.xlu0 0
      %2657 = vperm.xlu0 %2656, %v2635
      %v2658 = vpop.permute.xlu0 %2657
      %2661 = vset.pattern.permute.xlu0 0
      %2662 = vperm.xlu0 %2661, %v2636
      %v2663 = vpop.permute.xlu0 %2662
      %2666 = vset.pattern.permute.xlu0 0
      %2667 = vperm.xlu0 %2666, %v2637
      %v2668 = vpop.permute.xlu0 %2667
      %2671 = vset.pattern.permute.xlu0 0
      %2672 = vperm.xlu0 %2671, %v2638
      %v2673 = vpop.permute.xlu0 %2672
      %2676 = vset.pattern.permute.xlu0 0
      %2677 = vperm.xlu0 %2676, %v2639
      %v2678 = vpop.permute.xlu0 %2677
      %v2680 = vmul.f32 %v2448, %v2643
      %v2681 = vmul.f32 %v2449, %v2648
      %v2682 = vmul.f32 %v2450, %v2653
      %v2683 = vmul.f32 %v2451, %v2658
      %v2684 = vmul.f32 %v2452, %v2663
      %v2685 = vmul.f32 %v2453, %v2668
      %v2686 = vmul.f32 %v2454, %v2673
      %v2687 = vmul.f32 %v2455, %v2678
      %2688 = vst.msk [vmem:[%s438] sm:$0xff] %vm491, %v2680
      %2689 = vst.msk [vmem:[%s438 + $0x8] sm:$0xff] %vm491, %v2681
      %2690 = vst.msk [vmem:[%s438 + $0x10] sm:$0xff] %vm491, %v2682
      %2691 = vst.msk [vmem:[%s438 + $0x18] sm:$0xff] %vm491, %v2683
      %2692 = vst.msk [vmem:[%s438 + $0x20] sm:$0xff] %vm491, %v2684
      %2693 = vst.msk [vmem:[%s438 + $0x28] sm:$0xff] %vm491, %v2685
      %2694 = vst.msk [vmem:[%s438 + $0x30] sm:$0xff] %vm491, %v2686
      %2695 = vst.msk [vmem:[%s438 + $0x38] sm:$0xff] %vm491, %v2687
      %vm2696 = vcmask 7168
      %2697 = vst.msk [vmem:[%s444] sm:$0xff] %vm2696, %v2594
      %2698 = vst.msk [vmem:[%s444 + $0x8] sm:$0xff] %vm2696, %v2599
      %2699 = vst.msk [vmem:[%s444 + $0x10] sm:$0xff] %vm2696, %v2604
      %2700 = vst.msk [vmem:[%s444 + $0x18] sm:$0xff] %vm2696, %v2609
      %2701 = vst.msk [vmem:[%s444 + $0x20] sm:$0xff] %vm2696, %v2614
      %2702 = vst.msk [vmem:[%s444 + $0x28] sm:$0xff] %vm2696, %v2619
      %2703 = vst.msk [vmem:[%s444 + $0x30] sm:$0xff] %vm2696, %v2624
      %2704 = vst.msk [vmem:[%s444 + $0x38] sm:$0xff] %vm2696, %v2629
      %s2705 = smul.u32 8, %s22
      %p2706 = scmp.lt.s32.totalorder %s2705, 15
      %s2707 = scalar_select %p2706, %s2705, 15
      %s2708 = smul.addr %s2707, 8
      %s2709 = scalar_lea.vmem %s9, %s2708
      %s2710 = smul.u32 8, %s22
      %p2711 = scmp.lt.s32.totalorder %s2710, 15
      %s2712 = scalar_select %p2711, %s2710, 15
      %s2713 = smul.addr %s2712, 8
      %s2714 = scalar_lea.vmem %s10, %s2713
      // Predicated region
      $region57: #{conv_pool_block.1} parent=55 // pred_check
        %p2715 = pneg %p249
      $region58: #{conv_pool_block.1} parent=55 // pred_check_branch
        %2717 = sbr.rel (%p2715) target = $region60
      $region59: #{conv_pool_block.1} parent=55 // pred_region
        %s2718 = smul.u32 8, %s22
      $region60: #{conv_pool_block.1} parent=55 // pred_fallthru
        _
      // Predicated region
      $region61: #{conv_pool_block.1} parent=55 // pred_check
        %p2719 = pneg %p275
      $region62: #{conv_pool_block.1} parent=55 // pred_check_branch
        %2721 = sbr.rel (%p2719) target = $region64
      $region63: #{conv_pool_block.1} parent=55 // pred_region
        %s2722 = smul.u32 8, %s22
      $region64: #{conv_pool_block.1} parent=55 // pred_fallthru
        _
    $region56: #{conv_pool_block.1} parent=5 // pred_fallthru
      _
    %p2723 = scmp.le.s32.totalorder 2, %s17
    // Predicated region
    $region65: #{conv_pool_block.1} parent=5 // pred_check
      %p2724 = pneg %p2723
    $region66: #{conv_pool_block.1} parent=5 // pred_check_branch
      %2726 = sbr.rel (%p2724) target = $region68
    $region67: #{conv_pool_block.1} parent=5 // pred_region
      %s2727 = ssub.s32 %s17, 2
      // Predicated region
      $region69: #{conv_pool_block.1} parent=67 // pred_check
        %p2728 = pneg %p255
      $region70: #{conv_pool_block.1} parent=67 // pred_check_branch
        %2730 = sbr.rel (%p2728) target = $region72
      $region71: #{conv_pool_block.1} parent=67 // pred_region
        %s2731 = smul.u32 8, %s23
        %p2732 = scmp.lt.s32.totalorder %s2731, 15
        %s2733 = scalar_select %p2732, %s2731, 15
        %s2734 = smul.addr %s2733, 8
        %s2735 = scalar_lea.vmem %s9, %s2734
      $region72: #{conv_pool_block.1} parent=67 // pred_fallthru
        _
      // Predicated region
      $region73: #{conv_pool_block.1} parent=67 // pred_check
        %p2736 = pneg %p281
      $region74: #{conv_pool_block.1} parent=67 // pred_check_branch
        %2738 = sbr.rel (%p2736) target = $region76
      $region75: #{conv_pool_block.1} parent=67 // pred_region
        %s2739 = smul.u32 8, %s23
        %p2740 = scmp.lt.s32.totalorder %s2739, 15
        %s2741 = scalar_select %p2740, %s2739, 15
        %s2742 = smul.addr %s2741, 8
        %s2743 = scalar_lea.vmem %s10, %s2742
      $region76: #{conv_pool_block.1} parent=67 // pred_fallthru
        _
    $region68: #{conv_pool_block.1} parent=5 // pred_fallthru
      _
  $region6: #{conv_pool_block.1} parent=0 // loop_footer
    %s21 = sadd.s32 1, %s17
  $region7: #{conv_pool_block.1} parent=0 // loop_footer_branch
    %16 = sbr.rel target = $region3
  $region8: #{conv_pool_block.1} parent=0 // loop_exit
    _

</llo_original>
